<compile_context>
chip_gen: v7x
topology: tpu7x:2x2x1
jax: 0.10.0
libtpu: 0.0.40
codegen_flags: <defaults>
</compile_context>

<pallas_src>
import jax
import jax.numpy as jnp
from jax.experimental import pallas as pl
from jax.experimental.pallas import tpu as pltpu

LN_EPS = 1e-5


def _ln_normalize(h):
    """LayerNorm without the affine: (h - mu) * rsqrt(var + eps).

    Variance computed as E[h^2] - mu^2 so the two cross-lane reductions can
    overlap (clamped at 0 to guard against cancellation).
    """
    mu = jnp.mean(h, axis=-1, keepdims=True)
    var = jnp.mean(h * h, axis=-1, keepdims=True) - mu * mu
    var = jnp.maximum(var, 0.0)
    return (h - mu) * jax.lax.rsqrt(var + LN_EPS)


def transformer_kernel(
    x_ref,              # (tb, D)  f32 batch tile
    wvo_ref, bvo_ref,   # fused attention: (D, D) bf16, (1, D) f32
    g1_ref, be1_ref,    # LayerNorm1 affine: (1, D), (1, D) f32
    w1_ref, b1_ref,     # FFN linear1: (D, F) bf16, (1, F) f32
    w2_ref, b2_ref,     # FFN linear2: (F, D) bf16 (standard layout), (1, D) f32
    wfc_ref,            # head weight with LN2 gamma folded in: (1, D) f32
    bfc_ref,            # fused head bias: (1, 1) f32 in SMEM
    o_ref,              # (1, tb) f32 lane-dense output row
):
    x = x_ref[...]                                   # f32 activations

    # --- self-attention (seq_len == 1 => softmax weights are exactly 1) ---
    # Single fused bf16 matmul: x @ (Wv @ Wo) + (bv @ Wo + bo).
    sa = jnp.dot(x.astype(jnp.bfloat16), wvo_ref[...],
                 preferred_element_type=jnp.float32) + bvo_ref[...]

    # --- residual + LayerNorm1 (post-norm), all f32 ---
    h = _ln_normalize(x + sa) * g1_ref[...] + be1_ref[...]

    # --- feed-forward: Linear1 -> ReLU -> Linear2 (bf16 MXU, f32 accum) ---
    ff = jnp.dot(h.astype(jnp.bfloat16), w1_ref[...],
                 preferred_element_type=jnp.float32) + b1_ref[...]
    ff = jnp.maximum(ff, 0.0)
    ff2 = jnp.dot(ff.astype(jnp.bfloat16), w2_ref[...],
                  preferred_element_type=jnp.float32) + b2_ref[...]

    # --- residual + LayerNorm2 (affine folded into the head) ---
    h2 = _ln_normalize(h + ff2)

    # --- head (D -> 1): VPU multiply + lane reduction, stored lane-dense ---
    head = jnp.sum(h2 * wfc_ref[...], axis=-1) + bfc_ref[0, 0]   # (tb,)
    o_ref[...] = head.reshape(o_ref.shape)                       # (1, tb)


def transformer_forward(x, kparams, *, tb=None):
    B, D = x.shape
    if tb is None:
        # 256 fills the MXU M dimension on v6e/v7x (and is 2x128 rows on v5e)
        # while keeping the (tb, 2048) f32 FFN intermediate ~2 MiB, so no
        # vmem_limit bump is needed on any generation.
        tb = min(B, 256)
    assert B % tb == 0, "batch must be divisible by the batch tile"

    weights = (
        kparams["wvo"], kparams["bvo"],
        kparams["g1"], kparams["be1"],
        kparams["w1"], kparams["b1"],
        kparams["w2"], kparams["b2"],
        kparams["wfc"],
    )

    def resident(a):
        # One full-array block with a constant block index: DMA'd once,
        # VMEM-resident across all batch-tile grid steps.
        return pl.BlockSpec(a.shape, lambda i: (0,) * a.ndim)

    in_specs = (
        [pl.BlockSpec((tb, D), lambda i: (i, 0))]              # x batch tile
        + [resident(w) for w in weights]                        # weights/biases
        + [pl.BlockSpec((1, 1), lambda i: (0, 0),               # scalar head bias
                        memory_space=pltpu.MemorySpace.SMEM)]
    )

    out_row = pl.pallas_call(
        transformer_kernel,
        out_shape=jax.ShapeDtypeStruct((1, B), jnp.float32),    # lane-dense row
        grid=(B // tb,),
        in_specs=in_specs,
        out_specs=pl.BlockSpec((1, tb), lambda i: (0, i)),
        compiler_params=pltpu.CompilerParams(
            dimension_semantics=("parallel",)),
    )(x, *weights, kparams["bfc"])

    return out_row.reshape(B, 1)


def init_master_params(key, d_model, d_ff):
    """f32 master weights in math layout: y = x @ W + b."""
    ks = jax.random.split(key, 14)
    s = 0.02
    f32 = jnp.float32
    n = lambda k, shape: s * jax.random.normal(k, shape, f32)
    return {
        # V slice of in_proj_weight and attention out_proj (Q/K are irrelevant
        # for seq_len == 1 since softmax over a single key is 1).
        "wv": n(ks[0], (d_model, d_model)), "bv": n(ks[1], (1, d_model)),
        "wo": n(ks[2], (d_model, d_model)), "bo": n(ks[3], (1, d_model)),
        "g1": 1.0 + n(ks[4], (1, d_model)), "be1": n(ks[5], (1, d_model)),
        "w1": n(ks[6], (d_model, d_ff)),    "b1": n(ks[7], (1, d_ff)),
        "w2": n(ks[8], (d_ff, d_model)),    "b2": n(ks[9], (1, d_model)),
        "g2": 1.0 + n(ks[10], (1, d_model)), "be2": n(ks[11], (1, d_model)),
        "wfc": n(ks[12], (1, d_model)),     "bfc": n(ks[13], (1, 1)),
    }


def prepare_kernel_params(m):
    """Fold / quantize master weights into the layouts the kernel consumes."""
    bf16 = jnp.bfloat16
    # Fuse attention: fold in f32 FIRST, then cast to bf16 (keeps error small).
    wvo = (m["wv"] @ m["wo"]).astype(bf16)                 # (D, D)
    bvo = m["bv"] @ m["wo"] + m["bo"]                      # (1, D) f32
    # Fold LayerNorm2's affine into the head.
    wfc = m["g2"] * m["wfc"]                               # (1, D) f32
    bfc = jnp.sum(m["be2"] * m["wfc"]).reshape(1, 1) + m["bfc"]   # (1, 1) f32
    return {
        "wvo": wvo, "bvo": bvo,
        "g1": m["g1"], "be1": m["be1"],
        "w1": m["w1"].astype(bf16), "b1": m["b1"],
        "w2": m["w2"].astype(bf16), "b2": m["b2"],         # (F, D) standard layout
        "wfc": wfc, "bfc": bfc,
    }


def _ln_ref(h, g, b):
    mu = jnp.mean(h, axis=-1, keepdims=True)
    var = jnp.mean((h - mu) ** 2, axis=-1, keepdims=True)
    return (h - mu) * jax.lax.rsqrt(var + LN_EPS) * g + b


def reference_forward(x, m):
    """Pure-JAX reference: un-fused, all-f32 math against the master weights."""
    v = x @ m["wv"] + m["bv"]
    sa = v @ m["wo"] + m["bo"]                      # attention for seq_len == 1
    h = _ln_ref(x + sa, m["g1"], m["be1"])
    ff = jnp.maximum(h @ m["w1"] + m["b1"], 0.0)
    ff2 = ff @ m["w2"] + m["b2"]
    h2 = _ln_ref(h + ff2, m["g2"], m["be2"])
    return jnp.sum(h2 * m["wfc"], axis=-1, keepdims=True) + m["bfc"]


if __name__ == "__main__":
    B = 8          # batch
    D = 32         # input_dim / d_model (nhead resolves to 8; irrelevant to the
                   # output since attention over seq_len == 1 is identity)
    D_FF = 2048    # nn.TransformerEncoderLayer default dim_feedforward

    key = jax.random.PRNGKey(0)
    k_x, k_p = jax.random.split(key)
    x = jax.random.normal(k_x, (B, D), dtype=jnp.float32)

    master = init_master_params(k_p, D, D_FF)
    kparams = prepare_kernel_params(master)

    out = transformer_forward(x, kparams)
    out = jax.block_until_ready(out)
    assert out.shape == (B, 1) and out.dtype == jnp.float32

    ref = reference_forward(x, master)
    err = float(jnp.max(jnp.abs(out - ref)))
    assert err < 5e-2, f"max abs error {err}"
    print("KERNEL_OK")
</pallas_src>

<mosaic_0001>
module attributes {stable_mosaic.version = 11 : i64} {
  func.func @transformer_kernel(%arg0: i32, %arg1: memref<8x32xf32, #tpu.memory_space<vmem>>, %arg2: memref<32x32xbf16, #tpu.memory_space<vmem>>, %arg3: memref<1x32xf32, #tpu.memory_space<vmem>>, %arg4: memref<1x32xf32, #tpu.memory_space<vmem>>, %arg5: memref<1x32xf32, #tpu.memory_space<vmem>>, %arg6: memref<32x2048xbf16, #tpu.memory_space<vmem>>, %arg7: memref<1x2048xf32, #tpu.memory_space<vmem>>, %arg8: memref<2048x32xbf16, #tpu.memory_space<vmem>>, %arg9: memref<1x32xf32, #tpu.memory_space<vmem>>, %arg10: memref<1x32xf32, #tpu.memory_space<vmem>>, %arg11: memref<1x1xf32, #tpu.memory_space<smem>>, %arg12: memref<1x8xf32, #tpu.memory_space<vmem>>) attributes {dimension_semantics = [#tpu.dimension_semantics<parallel>], iteration_bounds = array<i64: 1>, scalar_prefetch = 0 : i64, scratch_operands = 0 : i64, tpu.core_type = #tpu.core_type<tc>, window_params = [{transform_indices = @transform_0, window_bounds = array<i64: 8, 32>}, {pipeline_mode = #tpu.pipeline_mode<synchronous>, transform_indices = @transform_1, window_bounds = array<i64: 32, 32>}, {pipeline_mode = #tpu.pipeline_mode<synchronous>, transform_indices = @transform_2, window_bounds = array<i64: 1, 32>}, {pipeline_mode = #tpu.pipeline_mode<synchronous>, transform_indices = @transform_3, window_bounds = array<i64: 1, 32>}, {pipeline_mode = #tpu.pipeline_mode<synchronous>, transform_indices = @transform_4, window_bounds = array<i64: 1, 32>}, {pipeline_mode = #tpu.pipeline_mode<synchronous>, transform_indices = @transform_5, window_bounds = array<i64: 32, 2048>}, {pipeline_mode = #tpu.pipeline_mode<synchronous>, transform_indices = @transform_6, window_bounds = array<i64: 1, 2048>}, {pipeline_mode = #tpu.pipeline_mode<synchronous>, transform_indices = @transform_7, window_bounds = array<i64: 2048, 32>}, {pipeline_mode = #tpu.pipeline_mode<synchronous>, transform_indices = @transform_8, window_bounds = array<i64: 1, 32>}, {pipeline_mode = #tpu.pipeline_mode<synchronous>, transform_indices = @transform_9, window_bounds = array<i64: 1, 32>}, {transform_indices = @transform_10, window_bounds = array<i64: 1, 1>}, {transform_indices = @transform_11, window_bounds = array<i64: 1, 8>}]} {
    %c0 = arith.constant 0 : index
    %c0_0 = arith.constant 0 : index
    %0 = vector.load %arg1[%c0, %c0_0] : memref<8x32xf32, #tpu.memory_space<vmem>>, vector<8x32xf32>
    %1 = arith.truncf %0 : vector<8x32xf32> to vector<8x32xbf16>
    %c0_1 = arith.constant 0 : index
    %c0_2 = arith.constant 0 : index
    %2 = vector.load %arg2[%c0_1, %c0_2] : memref<32x32xbf16, #tpu.memory_space<vmem>>, vector<32x32xbf16>
    %cst = arith.constant dense<0.000000e+00> : vector<8x32xf32>
    %3 = tpu.matmul %1, %2, %cst {dimension_numbers = #tpu.dot_dimension_numbers<[1], [0], [0], [1], [0, 0, 1, 1], [], []>} : vector<8x32xbf16>, vector<32x32xbf16>, vector<8x32xf32> -> vector<8x32xf32>
    %c0_3 = arith.constant 0 : index
    %c0_4 = arith.constant 0 : index
    %4 = vector.load %arg3[%c0_3, %c0_4] : memref<1x32xf32, #tpu.memory_space<vmem>>, vector<1x32xf32>
    %5 = vector.broadcast %4 : vector<1x32xf32> to vector<8x32xf32>
    %6 = arith.addf %3, %5 : vector<8x32xf32>
    %7 = arith.addf %0, %6 : vector<8x32xf32>
    %cst_5 = arith.constant dense<0.000000e+00> : vector<8xf32>
    %8 = vector.multi_reduction <add>, %7, %cst_5 [1] : vector<8x32xf32> to vector<8xf32>
    %9 = vector.shape_cast %8 : vector<8xf32> to vector<8x1xf32>
    %cst_6 = arith.constant 3.200000e+01 : f32
    %10 = vector.broadcast %cst_6 : f32 to vector<8x1xf32>
    %11 = arith.divf %9, %10 : vector<8x1xf32>
    %12 = arith.mulf %7, %7 : vector<8x32xf32>
    %cst_7 = arith.constant dense<0.000000e+00> : vector<8xf32>
    %13 = vector.multi_reduction <add>, %12, %cst_7 [1] : vector<8x32xf32> to vector<8xf32>
    %14 = vector.shape_cast %13 : vector<8xf32> to vector<8x1xf32>
    %cst_8 = arith.constant 3.200000e+01 : f32
    %15 = vector.broadcast %cst_8 : f32 to vector<8x1xf32>
    %16 = arith.divf %14, %15 : vector<8x1xf32>
    %17 = arith.mulf %11, %11 : vector<8x1xf32>
    %18 = arith.subf %16, %17 : vector<8x1xf32>
    %cst_9 = arith.constant 0.000000e+00 : f32
    %19 = vector.broadcast %cst_9 : f32 to vector<8x1xf32>
    %20 = arith.maximumf %18, %19 : vector<8x1xf32>
    %21 = vector.broadcast %11 : vector<8x1xf32> to vector<8x32xf32>
    %22 = arith.subf %7, %21 : vector<8x32xf32>
    %cst_10 = arith.constant 9.99999974E-6 : f32
    %23 = vector.broadcast %cst_10 : f32 to vector<8x1xf32>
    %24 = arith.addf %20, %23 : vector<8x1xf32>
    %25 = math.rsqrt %24 : vector<8x1xf32>
    %26 = vector.broadcast %25 : vector<8x1xf32> to vector<8x32xf32>
    %27 = arith.mulf %22, %26 : vector<8x32xf32>
    %c0_11 = arith.constant 0 : index
    %c0_12 = arith.constant 0 : index
    %28 = vector.load %arg4[%c0_11, %c0_12] : memref<1x32xf32, #tpu.memory_space<vmem>>, vector<1x32xf32>
    %29 = vector.broadcast %28 : vector<1x32xf32> to vector<8x32xf32>
    %30 = arith.mulf %27, %29 : vector<8x32xf32>
    %c0_13 = arith.constant 0 : index
    %c0_14 = arith.constant 0 : index
    %31 = vector.load %arg5[%c0_13, %c0_14] : memref<1x32xf32, #tpu.memory_space<vmem>>, vector<1x32xf32>
    %32 = vector.broadcast %31 : vector<1x32xf32> to vector<8x32xf32>
    %33 = arith.addf %30, %32 : vector<8x32xf32>
    %34 = arith.truncf %33 : vector<8x32xf32> to vector<8x32xbf16>
    %c0_15 = arith.constant 0 : index
    %c0_16 = arith.constant 0 : index
    %35 = vector.load %arg6[%c0_15, %c0_16] : memref<32x2048xbf16, #tpu.memory_space<vmem>>, vector<32x2048xbf16>
    %cst_17 = arith.constant dense<0.000000e+00> : vector<8x2048xf32>
    %36 = tpu.matmul %34, %35, %cst_17 {dimension_numbers = #tpu.dot_dimension_numbers<[1], [0], [0], [1], [0, 0, 1, 1], [], []>} : vector<8x32xbf16>, vector<32x2048xbf16>, vector<8x2048xf32> -> vector<8x2048xf32>
    %c0_18 = arith.constant 0 : index
    %c0_19 = arith.constant 0 : index
    %37 = vector.load %arg7[%c0_18, %c0_19] : memref<1x2048xf32, #tpu.memory_space<vmem>>, vector<1x2048xf32>
    %38 = vector.broadcast %37 : vector<1x2048xf32> to vector<8x2048xf32>
    %39 = arith.addf %36, %38 : vector<8x2048xf32>
    %cst_20 = arith.constant 0.000000e+00 : f32
    %40 = vector.broadcast %cst_20 : f32 to vector<8x2048xf32>
    %41 = arith.maximumf %39, %40 : vector<8x2048xf32>
    %42 = arith.truncf %41 : vector<8x2048xf32> to vector<8x2048xbf16>
    %c0_21 = arith.constant 0 : index
    %c0_22 = arith.constant 0 : index
    %43 = vector.load %arg8[%c0_21, %c0_22] : memref<2048x32xbf16, #tpu.memory_space<vmem>>, vector<2048x32xbf16>
    %cst_23 = arith.constant dense<0.000000e+00> : vector<8x32xf32>
    %44 = tpu.matmul %42, %43, %cst_23 {dimension_numbers = #tpu.dot_dimension_numbers<[1], [0], [0], [1], [0, 0, 1, 1], [], []>} : vector<8x2048xbf16>, vector<2048x32xbf16>, vector<8x32xf32> -> vector<8x32xf32>
    %c0_24 = arith.constant 0 : index
    %c0_25 = arith.constant 0 : index
    %45 = vector.load %arg9[%c0_24, %c0_25] : memref<1x32xf32, #tpu.memory_space<vmem>>, vector<1x32xf32>
    %46 = vector.broadcast %45 : vector<1x32xf32> to vector<8x32xf32>
    %47 = arith.addf %44, %46 : vector<8x32xf32>
    %48 = arith.addf %33, %47 : vector<8x32xf32>
    %cst_26 = arith.constant dense<0.000000e+00> : vector<8xf32>
    %49 = vector.multi_reduction <add>, %48, %cst_26 [1] : vector<8x32xf32> to vector<8xf32>
    %50 = vector.shape_cast %49 : vector<8xf32> to vector<8x1xf32>
    %cst_27 = arith.constant 3.200000e+01 : f32
    %51 = vector.broadcast %cst_27 : f32 to vector<8x1xf32>
    %52 = arith.divf %50, %51 : vector<8x1xf32>
    %53 = arith.mulf %48, %48 : vector<8x32xf32>
    %cst_28 = arith.constant dense<0.000000e+00> : vector<8xf32>
    %54 = vector.multi_reduction <add>, %53, %cst_28 [1] : vector<8x32xf32> to vector<8xf32>
    %55 = vector.shape_cast %54 : vector<8xf32> to vector<8x1xf32>
    %cst_29 = arith.constant 3.200000e+01 : f32
    %56 = vector.broadcast %cst_29 : f32 to vector<8x1xf32>
    %57 = arith.divf %55, %56 : vector<8x1xf32>
    %58 = arith.mulf %52, %52 : vector<8x1xf32>
    %59 = arith.subf %57, %58 : vector<8x1xf32>
    %cst_30 = arith.constant 0.000000e+00 : f32
    %60 = vector.broadcast %cst_30 : f32 to vector<8x1xf32>
    %61 = arith.maximumf %59, %60 : vector<8x1xf32>
    %62 = vector.broadcast %52 : vector<8x1xf32> to vector<8x32xf32>
    %63 = arith.subf %48, %62 : vector<8x32xf32>
    %cst_31 = arith.constant 9.99999974E-6 : f32
    %64 = vector.broadcast %cst_31 : f32 to vector<8x1xf32>
    %65 = arith.addf %61, %64 : vector<8x1xf32>
    %66 = math.rsqrt %65 : vector<8x1xf32>
    %67 = vector.broadcast %66 : vector<8x1xf32> to vector<8x32xf32>
    %68 = arith.mulf %63, %67 : vector<8x32xf32>
    %c0_32 = arith.constant 0 : index
    %c0_33 = arith.constant 0 : index
    %69 = vector.load %arg10[%c0_32, %c0_33] : memref<1x32xf32, #tpu.memory_space<vmem>>, vector<1x32xf32>
    %70 = vector.broadcast %69 : vector<1x32xf32> to vector<8x32xf32>
    %71 = arith.mulf %68, %70 : vector<8x32xf32>
    %cst_34 = arith.constant dense<0.000000e+00> : vector<8xf32>
    %72 = vector.multi_reduction <add>, %71, %cst_34 [1] : vector<8x32xf32> to vector<8xf32>
    %c0_35 = arith.constant 0 : index
    %c0_36 = arith.constant 0 : index
    %73 = memref.load %arg11[%c0_35, %c0_36] : memref<1x1xf32, #tpu.memory_space<smem>>
    %74 = vector.broadcast %73 : f32 to vector<8xf32>
    %75 = arith.addf %72, %74 : vector<8xf32>
    %76 = vector.shape_cast %75 : vector<8xf32> to vector<1x8xf32>
    %c0_37 = arith.constant 0 : index
    %c0_38 = arith.constant 0 : index
    %77 = vector.load %arg12[%c0_37, %c0_38] : memref<1x8xf32, #tpu.memory_space<vmem>>, vector<1x8xf32>
    tpu.vector_store %arg12[%c0_37, %c0_38], %76 {strides = array<i32>} : memref<1x8xf32, #tpu.memory_space<vmem>>, vector<1x8xf32>,
    return
  }
  func.func @transform_0(%arg0: i32) -> (i32, i32) {
    %c0_i32 = arith.constant 0 : i32
    %c0_i32_0 = arith.constant 0 : i32
    return %arg0, %c0_i32 : i32, i32
  }
  func.func @transform_1(%arg0: i32) -> (i32, i32) {
    %c0_i32 = arith.constant 0 : i32
    %c0_i32_0 = arith.constant 0 : i32
    %c0_i32_1 = arith.constant 0 : i32
    return %c0_i32, %c0_i32_0 : i32, i32
  }
  func.func @transform_2(%arg0: i32) -> (i32, i32) {
    %c0_i32 = arith.constant 0 : i32
    %c0_i32_0 = arith.constant 0 : i32
    %c0_i32_1 = arith.constant 0 : i32
    return %c0_i32, %c0_i32_0 : i32, i32
  }
  func.func @transform_3(%arg0: i32) -> (i32, i32) {
    %c0_i32 = arith.constant 0 : i32
    %c0_i32_0 = arith.constant 0 : i32
    %c0_i32_1 = arith.constant 0 : i32
    return %c0_i32, %c0_i32_0 : i32, i32
  }
  func.func @transform_4(%arg0: i32) -> (i32, i32) {
    %c0_i32 = arith.constant 0 : i32
    %c0_i32_0 = arith.constant 0 : i32
    %c0_i32_1 = arith.constant 0 : i32
    return %c0_i32, %c0_i32_0 : i32, i32
  }
  func.func @transform_5(%arg0: i32) -> (i32, i32) {
    %c0_i32 = arith.constant 0 : i32
    %c0_i32_0 = arith.constant 0 : i32
    %c0_i32_1 = arith.constant 0 : i32
    return %c0_i32, %c0_i32_0 : i32, i32
  }
  func.func @transform_6(%arg0: i32) -> (i32, i32) {
    %c0_i32 = arith.constant 0 : i32
    %c0_i32_0 = arith.constant 0 : i32
    %c0_i32_1 = arith.constant 0 : i32
    return %c0_i32, %c0_i32_0 : i32, i32
  }
  func.func @transform_7(%arg0: i32) -> (i32, i32) {
    %c0_i32 = arith.constant 0 : i32
    %c0_i32_0 = arith.constant 0 : i32
    %c0_i32_1 = arith.constant 0 : i32
    return %c0_i32, %c0_i32_0 : i32, i32
  }
  func.func @transform_8(%arg0: i32) -> (i32, i32) {
    %c0_i32 = arith.constant 0 : i32
    %c0_i32_0 = arith.constant 0 : i32
    %c0_i32_1 = arith.constant 0 : i32
    return %c0_i32, %c0_i32_0 : i32, i32
  }
  func.func @transform_9(%arg0: i32) -> (i32, i32) {
    %c0_i32 = arith.constant 0 : i32
    %c0_i32_0 = arith.constant 0 : i32
    %c0_i32_1 = arith.constant 0 : i32
    return %c0_i32, %c0_i32_0 : i32, i32
  }
  func.func @transform_10(%arg0: i32) -> (i32, i32) {
    %c0_i32 = arith.constant 0 : i32
    %c0_i32_0 = arith.constant 0 : i32
    %c0_i32_1 = arith.constant 0 : i32
    return %c0_i32, %c0_i32_0 : i32, i32
  }
  func.func @transform_11(%arg0: i32) -> (i32, i32) {
    %c0_i32 = arith.constant 0 : i32
    %c0_i32_0 = arith.constant 0 : i32
    return %c0_i32, %arg0 : i32, i32
  }
}

</mosaic_0001>

<llo_original>
// kernel: tpu_custom_call.1
$region0: #{tpu_custom_call.1}
  #allocation0 [shape = 'u32[]', space=smem, size = 0x4, offset = 0x4, fixed_abs, tag = 'smem constant byte address 0x4 - core index']
  #allocation1 [shape = 'u32[144,128]{1,0:T(1,128)}', space=vmem, size = 0x12000, scoped, tag = 'internal scratch']
  #allocation2 [shape = 'f32[1,1]{1,0:T(1,128)S(6)}', space=smem, size = 0x200, scoped, tag = 'scoped memory for tpu_custom_call.1']
  %s0 = inlined_call_operand.vmem [shape: f32[8,32], index: 0, kind: input, shape index: {}]
  %s1 = inlined_call_operand.vmem [shape: bf16[32,32], index: 1, kind: input, shape index: {}]
  %s2 = inlined_call_operand.vmem [shape: f32[1,32], index: 2, kind: input, shape index: {}]
  %s3 = inlined_call_operand.vmem [shape: f32[1,32], index: 3, kind: input, shape index: {}]
  %s4 = inlined_call_operand.vmem [shape: f32[1,32], index: 4, kind: input, shape index: {}]
  %s5 = inlined_call_operand.vmem [shape: bf16[32,2048], index: 5, kind: input, shape index: {}]
  %s6 = inlined_call_operand.vmem [shape: f32[1,2048], index: 6, kind: input, shape index: {}]
  %s7 = inlined_call_operand.vmem [shape: bf16[2048,32], index: 7, kind: input, shape index: {}]
  %s8 = inlined_call_operand.vmem [shape: f32[1,32], index: 8, kind: input, shape index: {}]
  %s9 = inlined_call_operand.vmem [shape: f32[1,32], index: 9, kind: input, shape index: {}]
  %s10 = inlined_call_operand.<no memory space> [shape: f32[1,1], index: 10, kind: input, shape index: {}]
  %s11 = inlined_call_operand.hbm [shape: f32[1,8], index: 11, kind: output, shape index: {}]
  %s12 = sld [smem:[#allocation0]]
  $region54: #{tpu_custom_call.1} parent=0
    _
  %s14 = ssub.s32 1, %s12
  %s15 = scalar_select 0, %s14, %s12
  %16 = sst [smem:[#allocation2]] %s10
  $region1: #{tpu_custom_call.1} parent=0
    #allocation3 [shape = 'u8[512]{0}', space=vmem, size = 0x400, scoped, tag = 'output window, operand 0, single buffered']
    #allocation4 [shape = 's32[1]{0}', space=sflag, size = 0x4, scoped, tag = 'scoped memory for tpu_custom_call.1']
    %17 = vsyncpa [#allocation4], 0
    // Predicated region
    $region2: #{tpu_custom_call.1} parent=1 // pred_check
      _
    $region3: #{tpu_custom_call.1} parent=1 // pred_check_branch
      %19 = sbr.rel (0) target = $region5
    $region4: #{tpu_custom_call.1} parent=1 // pred_region
      _
    $region5: #{tpu_custom_call.1} parent=1 // pred_fallthru
      _
    // Predicated region
    $region6: #{tpu_custom_call.1} parent=1 // pred_check
      _
    $region7: #{tpu_custom_call.1} parent=1 // pred_check_branch
      %21 = sbr.rel (0) target = $region9
    $region8: #{tpu_custom_call.1} parent=1 // pred_region
      _
    $region9: #{tpu_custom_call.1} parent=1 // pred_fallthru
      _
    // Predicated region
    $region10: #{tpu_custom_call.1} parent=1 // pred_check
      _
    $region11: #{tpu_custom_call.1} parent=1 // pred_check_branch
      %23 = sbr.rel (0) target = $region13
    $region12: #{tpu_custom_call.1} parent=1 // pred_region
      _
    $region13: #{tpu_custom_call.1} parent=1 // pred_fallthru
      _
    // Predicated region
    $region14: #{tpu_custom_call.1} parent=1 // pred_check
      _
    $region15: #{tpu_custom_call.1} parent=1 // pred_check_branch
      %25 = sbr.rel (0) target = $region17
    $region16: #{tpu_custom_call.1} parent=1 // pred_region
      _
    $region17: #{tpu_custom_call.1} parent=1 // pred_fallthru
      _
    // Predicated region
    $region18: #{tpu_custom_call.1} parent=1 // pred_check
      _
    $region19: #{tpu_custom_call.1} parent=1 // pred_check_branch
      %27 = sbr.rel (0) target = $region21
    $region20: #{tpu_custom_call.1} parent=1 // pred_region
      _
    $region21: #{tpu_custom_call.1} parent=1 // pred_fallthru
      _
    // Predicated region
    $region22: #{tpu_custom_call.1} parent=1 // pred_check
      _
    $region23: #{tpu_custom_call.1} parent=1 // pred_check_branch
      %29 = sbr.rel (0) target = $region25
    $region24: #{tpu_custom_call.1} parent=1 // pred_region
      _
    $region25: #{tpu_custom_call.1} parent=1 // pred_fallthru
      _
    // Predicated region
    $region26: #{tpu_custom_call.1} parent=1 // pred_check
      _
    $region27: #{tpu_custom_call.1} parent=1 // pred_check_branch
      %31 = sbr.rel (0) target = $region29
    $region28: #{tpu_custom_call.1} parent=1 // pred_region
      _
    $region29: #{tpu_custom_call.1} parent=1 // pred_fallthru
      _
    // Predicated region
    $region30: #{tpu_custom_call.1} parent=1 // pred_check
      _
    $region31: #{tpu_custom_call.1} parent=1 // pred_check_branch
      %33 = sbr.rel (0) target = $region33
    $region32: #{tpu_custom_call.1} parent=1 // pred_region
      _
    $region33: #{tpu_custom_call.1} parent=1 // pred_fallthru
      _
    // Predicated region
    $region34: #{tpu_custom_call.1} parent=1 // pred_check
      _
    $region35: #{tpu_custom_call.1} parent=1 // pred_check_branch
      %35 = sbr.rel (0) target = $region37
    $region36: #{tpu_custom_call.1} parent=1 // pred_region
      _
    $region37: #{tpu_custom_call.1} parent=1 // pred_fallthru
      _
    // Predicated region
    $region38: #{tpu_custom_call.1} parent=1 // pred_check
      _
    $region39: #{tpu_custom_call.1} parent=1 // pred_check_branch
      %37 = sbr.rel (0) target = $region41
    $region40: #{tpu_custom_call.1} parent=1 // pred_region
      _
    $region41: #{tpu_custom_call.1} parent=1 // pred_fallthru
      _
    // Predicated region
    $region42: #{tpu_custom_call.1} parent=1 // pred_check
      _
    $region43: #{tpu_custom_call.1} parent=1 // pred_check_branch
      %39 = sbr.rel (0) target = $region45
    $region44: #{tpu_custom_call.1} parent=1 // pred_region
      _
    $region45: #{tpu_custom_call.1} parent=1 // pred_fallthru
      _
    %v41 = vld [vmem:[%s0] sm:$0xff]
    %v42 = vpack.c.bf16 %v41, %v41
    %v43 = vld [vmem:[%s1] sm:$0xf]
    %v44 = vld [vmem:[%s1 + $0x4] sm:$0xf]
    %v45 = vld [vmem:[%s1 + $0x8] sm:$0xf]
    %v46 = vld [vmem:[%s1 + $0xc] sm:$0xf]
    %v47 = vld [vmem:[%s2] sm:$0x1]
    %v49 = vlaneseq
    %v50 = vshrl.u32 %v49, 7
    %v51 = vsub.s32 0, %v50
    %v52 = vrot.slane %v47, %v51
    %v58 = vunpack.c.l.b16 %v43
    %v59 = vunpack.c.l.b16 %v44
    %v60 = vunpack.c.l.b16 %v45
    %v61 = vunpack.c.l.b16 %v46
    %v62 = vpack.c.b16 %v59, %v58
    %v63 = vpack.c.b16 %v61, %v60
    %vm66 = vcmask 261120
    %v68 = vsel %vm66, %v42, 0
    %70 = vmatprep.subr.bf16.mxu0 0
    %71 = vmatpush1.bf16.msra.mxu0 %v62
    %72 = vmatprep.subr.bf16.mxu0 0
    %73 = vmatpush1.bf16.msra.mxu0 %v63
    %74 = vmatprep.subr.bf16.mxu0 0
    %75 = vmatpush1.bf16.msra.mxu0 0
    %76 = vmatprep.subr.bf16.mxu0 0
    %77 = vmatpush1.bf16.msra.mxu0 0
    %78 = vmatprep.subr.bf16.mxu0 0
    %79 = vmatpush1.bf16.msra.mxu0 0
    %80 = vmatprep.subr.bf16.mxu0 0
    %81 = vmatpush1.bf16.msra.mxu0 0
    %82 = vmatprep.subr.bf16.mxu0 0
    %83 = vmatpush1.bf16.msra.mxu0 0
    %84 = vmatprep.subr.bf16.mxu0 0
    %85 = vmatpush1.bf16.msra.mxu0 0
    %86 = vmatprep.subr.bf16.mxu0 0
    %87 = vmatpush1.bf16.msra.mxu0 0
    %88 = vmatprep.subr.bf16.mxu0 0
    %89 = vmatpush1.bf16.msra.mxu0 0
    %90 = vmatprep.subr.bf16.mxu0 0
    %91 = vmatpush1.bf16.msra.mxu0 0
    %92 = vmatprep.subr.bf16.mxu0 0
    %93 = vmatpush1.bf16.msra.mxu0 0
    %94 = vmatprep.subr.bf16.mxu0 0
    %95 = vmatpush1.bf16.msra.mxu0 0
    %96 = vmatprep.subr.bf16.mxu0 0
    %97 = vmatpush1.bf16.msra.mxu0 0
    %98 = vmatprep.subr.bf16.mxu0 0
    %99 = vmatpush1.bf16.msra.mxu0 0
    %100 = vmatprep.subr.bf16.mxu0 0
    %101 = vmatpush1.bf16.msra.mxu0 0
    %102 = vmatprep.mubr.bf16.mxu0 0
    %103 = vmatmul.mubr.bf16.gmra.mrb[0].mxu0 %v68
    %v104 = vpop.f32.mrb[0].mxu0
    %v105 = vadd.f32 %v52, %v104
    %v106 = vpop.f32.mrb[0].mxu0
    %v107 = vpop.f32.mrb[0].mxu0
    %v108 = vpop.f32.mrb[0].mxu0
    %109 = vdwg.mxu0
    %v110 = vadd.f32 %v41, %v105
    %v111 = vsel %vm66, %v110, 0.0
    %112 = vadd.xlane.f32.xlu0 %v111
    %v113 = vpop.xlane.xlu0 %112
    %v114 = vrcp.pop 32.0
    %v115 = vmul.f32 %v113, %v114
    %v116 = vmul.f32 %v110, %v110
    %v117 = vsel %vm66, %v116, 0.0
    %118 = vadd.xlane.f32.xlu0 %v117
    %v119 = vpop.xlane.xlu0 %118
    %v120 = vmul.f32 %v119, %v114
    %v121 = vmul.f32 %v115, %v115
    %v122 = vsub.f32 %v120, %v121
    %v123 = vmax.f32 %v122, 0.0
    %v124 = vsub.f32 %v110, %v115
    %v125 = vadd.f32 %v123, 1e-05
    %v126 = vrsqrt.pop %v125
    %v127 = vmul.f32 %v124, %v126
    %v128 = vld [vmem:[%s3] sm:$0x1]
    %v130 = vlaneseq
    %v131 = vshrl.u32 %v130, 7
    %v132 = vsub.s32 0, %v131
    %v133 = vrot.slane %v128, %v132
    %v135 = vmul.f32 %v127, %v133
    %v136 = vld [vmem:[%s4] sm:$0x1]
    %v138 = vlaneseq
    %v139 = vshrl.u32 %v138, 7
    %v140 = vsub.s32 0, %v139
    %v141 = vrot.slane %v136, %v140
    %v143 = vadd.f32 %v135, %v141
    %v144 = vpack.c.bf16 %v143, %v143
    %v145 = vld [vmem:[%s5] sm:$0xff]
    %v146 = vld [vmem:[%s5 + $0x8] sm:$0xff]
    %v147 = vld [vmem:[%s5 + $0x10] sm:$0xff]
    %v148 = vld [vmem:[%s5 + $0x18] sm:$0xff]
    %v149 = vld [vmem:[%s5 + $0x20] sm:$0xff]
    %v150 = vld [vmem:[%s5 + $0x28] sm:$0xff]
    %v151 = vld [vmem:[%s5 + $0x30] sm:$0xff]
    %v152 = vld [vmem:[%s5 + $0x38] sm:$0xff]
    %v153 = vld [vmem:[%s5 + $0x40] sm:$0xff]
    %v154 = vld [vmem:[%s5 + $0x48] sm:$0xff]
    %v155 = vld [vmem:[%s5 + $0x50] sm:$0xff]
    %v156 = vld [vmem:[%s5 + $0x58] sm:$0xff]
    %v157 = vld [vmem:[%s5 + $0x60] sm:$0xff]
    %v158 = vld [vmem:[%s5 + $0x68] sm:$0xff]
    %v159 = vld [vmem:[%s5 + $0x70] sm:$0xff]
    %v160 = vld [vmem:[%s5 + $0x78] sm:$0xff]
    %v161 = vld [vmem:[%s5 + $0x80] sm:$0xff]
    %v162 = vld [vmem:[%s5 + $0x88] sm:$0xff]
    %v163 = vld [vmem:[%s5 + $0x90] sm:$0xff]
    %v164 = vld [vmem:[%s5 + $0x98] sm:$0xff]
    %v165 = vld [vmem:[%s5 + $0xa0] sm:$0xff]
    %v166 = vld [vmem:[%s5 + $0xa8] sm:$0xff]
    %v167 = vld [vmem:[%s5 + $0xb0] sm:$0xff]
    %v168 = vld [vmem:[%s5 + $0xb8] sm:$0xff]
    %v169 = vld [vmem:[%s5 + $0xc0] sm:$0xff]
    %v170 = vld [vmem:[%s5 + $0xc8] sm:$0xff]
    %v171 = vld [vmem:[%s5 + $0xd0] sm:$0xff]
    %v172 = vld [vmem:[%s5 + $0xd8] sm:$0xff]
    %v173 = vld [vmem:[%s5 + $0xe0] sm:$0xff]
    %v174 = vld [vmem:[%s5 + $0xe8] sm:$0xff]
    %v175 = vld [vmem:[%s5 + $0xf0] sm:$0xff]
    %v176 = vld [vmem:[%s5 + $0xf8] sm:$0xff]
    %v177 = vld [vmem:[%s6] sm:$0xff]
    %v178 = vld [vmem:[%s6 + $0x8] sm:$0xff]
    %v181 = vlaneseq
    %v182 = vshrl.u32 %v181, 7
    %v183 = vsub.s32 0, %v182
    %v184 = vrot.slane %v177, %v183
    %v185 = vlaneseq
    %v186 = vshrl.u32 %v185, 7
    %v187 = vsub.s32 1, %v186
    %v188 = vrot.slane %v177, %v187
    %v189 = vlaneseq
    %v190 = vshrl.u32 %v189, 7
    %v191 = vsub.s32 2, %v190
    %v192 = vrot.slane %v177, %v191
    %v193 = vlaneseq
    %v194 = vshrl.u32 %v193, 7
    %v195 = vsub.s32 3, %v194
    %v196 = vrot.slane %v177, %v195
    %v197 = vlaneseq
    %v198 = vshrl.u32 %v197, 7
    %v199 = vsub.s32 4, %v198
    %v200 = vrot.slane %v177, %v199
    %v201 = vlaneseq
    %v202 = vshrl.u32 %v201, 7
    %v203 = vsub.s32 5, %v202
    %v204 = vrot.slane %v177, %v203
    %v205 = vlaneseq
    %v206 = vshrl.u32 %v205, 7
    %v207 = vsub.s32 6, %v206
    %v208 = vrot.slane %v177, %v207
    %v209 = vlaneseq
    %v210 = vshrl.u32 %v209, 7
    %v211 = vsub.s32 7, %v210
    %v212 = vrot.slane %v177, %v211
    %v213 = vlaneseq
    %v214 = vshrl.u32 %v213, 7
    %v215 = vsub.s32 0, %v214
    %v216 = vrot.slane %v178, %v215
    %v217 = vlaneseq
    %v218 = vshrl.u32 %v217, 7
    %v219 = vsub.s32 1, %v218
    %v220 = vrot.slane %v178, %v219
    %v221 = vlaneseq
    %v222 = vshrl.u32 %v221, 7
    %v223 = vsub.s32 2, %v222
    %v224 = vrot.slane %v178, %v223
    %v225 = vlaneseq
    %v226 = vshrl.u32 %v225, 7
    %v227 = vsub.s32 3, %v226
    %v228 = vrot.slane %v178, %v227
    %v229 = vlaneseq
    %v230 = vshrl.u32 %v229, 7
    %v231 = vsub.s32 4, %v230
    %v232 = vrot.slane %v178, %v231
    %v233 = vlaneseq
    %v234 = vshrl.u32 %v233, 7
    %v235 = vsub.s32 5, %v234
    %v236 = vrot.slane %v178, %v235
    %v237 = vlaneseq
    %v238 = vshrl.u32 %v237, 7
    %v239 = vsub.s32 6, %v238
    %v240 = vrot.slane %v178, %v239
    %v241 = vlaneseq
    %v242 = vshrl.u32 %v241, 7
    %v243 = vsub.s32 7, %v242
    %v244 = vrot.slane %v178, %v243
    %v293 = vunpack.c.l.b16 %v145
    %v294 = vunpack.c.h.b16 %v145
    %v295 = vunpack.c.l.b16 %v146
    %v296 = vunpack.c.h.b16 %v146
    %v297 = vunpack.c.l.b16 %v147
    %v298 = vunpack.c.h.b16 %v147
    %v299 = vunpack.c.l.b16 %v148
    %v300 = vunpack.c.h.b16 %v148
    %v301 = vunpack.c.l.b16 %v149
    %v302 = vunpack.c.h.b16 %v149
    %v303 = vunpack.c.l.b16 %v150
    %v304 = vunpack.c.h.b16 %v150
    %v305 = vunpack.c.l.b16 %v151
    %v306 = vunpack.c.h.b16 %v151
    %v307 = vunpack.c.l.b16 %v152
    %v308 = vunpack.c.h.b16 %v152
    %v309 = vunpack.c.l.b16 %v153
    %v310 = vunpack.c.h.b16 %v153
    %v311 = vunpack.c.l.b16 %v154
    %v312 = vunpack.c.h.b16 %v154
    %v313 = vunpack.c.l.b16 %v155
    %v314 = vunpack.c.h.b16 %v155
    %v315 = vunpack.c.l.b16 %v156
    %v316 = vunpack.c.h.b16 %v156
    %v317 = vunpack.c.l.b16 %v157
    %v318 = vunpack.c.h.b16 %v157
    %v319 = vunpack.c.l.b16 %v158
    %v320 = vunpack.c.h.b16 %v158
    %v321 = vunpack.c.l.b16 %v159
    %v322 = vunpack.c.h.b16 %v159
    %v323 = vunpack.c.l.b16 %v160
    %v324 = vunpack.c.h.b16 %v160
    %v325 = vunpack.c.l.b16 %v161
    %v326 = vunpack.c.h.b16 %v161
    %v327 = vunpack.c.l.b16 %v162
    %v328 = vunpack.c.h.b16 %v162
    %v329 = vunpack.c.l.b16 %v163
    %v330 = vunpack.c.h.b16 %v163
    %v331 = vunpack.c.l.b16 %v164
    %v332 = vunpack.c.h.b16 %v164
    %v333 = vunpack.c.l.b16 %v165
    %v334 = vunpack.c.h.b16 %v165
    %v335 = vunpack.c.l.b16 %v166
    %v336 = vunpack.c.h.b16 %v166
    %v337 = vunpack.c.l.b16 %v167
    %v338 = vunpack.c.h.b16 %v167
    %v339 = vunpack.c.l.b16 %v168
    %v340 = vunpack.c.h.b16 %v168
    %v341 = vunpack.c.l.b16 %v169
    %v342 = vunpack.c.h.b16 %v169
    %v343 = vunpack.c.l.b16 %v170
    %v344 = vunpack.c.h.b16 %v170
    %v345 = vunpack.c.l.b16 %v171
    %v346 = vunpack.c.h.b16 %v171
    %v347 = vunpack.c.l.b16 %v172
    %v348 = vunpack.c.h.b16 %v172
    %v349 = vunpack.c.l.b16 %v173
    %v350 = vunpack.c.h.b16 %v173
    %v351 = vunpack.c.l.b16 %v174
    %v352 = vunpack.c.h.b16 %v174
    %v353 = vunpack.c.l.b16 %v175
    %v354 = vunpack.c.h.b16 %v175
    %v355 = vunpack.c.l.b16 %v176
    %v356 = vunpack.c.h.b16 %v176
    %v357 = vpack.c.b16 %v309, %v293
    %v358 = vpack.c.b16 %v310, %v294
    %v359 = vpack.c.b16 %v311, %v295
    %v360 = vpack.c.b16 %v312, %v296
    %v361 = vpack.c.b16 %v313, %v297
    %v362 = vpack.c.b16 %v314, %v298
    %v363 = vpack.c.b16 %v315, %v299
    %v364 = vpack.c.b16 %v316, %v300
    %v365 = vpack.c.b16 %v317, %v301
    %v366 = vpack.c.b16 %v318, %v302
    %v367 = vpack.c.b16 %v319, %v303
    %v368 = vpack.c.b16 %v320, %v304
    %v369 = vpack.c.b16 %v321, %v305
    %v370 = vpack.c.b16 %v322, %v306
    %v371 = vpack.c.b16 %v323, %v307
    %v372 = vpack.c.b16 %v324, %v308
    %v373 = vpack.c.b16 %v341, %v325
    %v374 = vpack.c.b16 %v342, %v326
    %v375 = vpack.c.b16 %v343, %v327
    %v376 = vpack.c.b16 %v344, %v328
    %v377 = vpack.c.b16 %v345, %v329
    %v378 = vpack.c.b16 %v346, %v330
    %v379 = vpack.c.b16 %v347, %v331
    %v380 = vpack.c.b16 %v348, %v332
    %v381 = vpack.c.b16 %v349, %v333
    %v382 = vpack.c.b16 %v350, %v334
    %v383 = vpack.c.b16 %v351, %v335
    %v384 = vpack.c.b16 %v352, %v336
    %v385 = vpack.c.b16 %v353, %v337
    %v386 = vpack.c.b16 %v354, %v338
    %v387 = vpack.c.b16 %v355, %v339
    %v388 = vpack.c.b16 %v356, %v340
    %v422 = vsel %vm66, %v144, 0
    %424 = vmatprep.subr.bf16.mxu0 %v358
    %425 = vmatpush1.bf16.msra.mxu0 %v357
    %426 = vmatprep.subr.bf16.mxu0 %v374
    %427 = vmatpush1.bf16.msra.mxu0 %v373
    %428 = vmatprep.subr.bf16.mxu0 0
    %429 = vmatpush1.bf16.msra.mxu0 0
    %430 = vmatprep.subr.bf16.mxu0 0
    %431 = vmatpush1.bf16.msra.mxu0 0
    %432 = vmatprep.subr.bf16.mxu0 0
    %433 = vmatpush1.bf16.msra.mxu0 0
    %434 = vmatprep.subr.bf16.mxu0 0
    %435 = vmatpush1.bf16.msra.mxu0 0
    %436 = vmatprep.subr.bf16.mxu0 0
    %437 = vmatpush1.bf16.msra.mxu0 0
    %438 = vmatprep.subr.bf16.mxu0 0
    %439 = vmatpush1.bf16.msra.mxu0 0
    %440 = vmatprep.subr.bf16.mxu0 0
    %441 = vmatpush1.bf16.msra.mxu0 0
    %442 = vmatprep.subr.bf16.mxu0 0
    %443 = vmatpush1.bf16.msra.mxu0 0
    %444 = vmatprep.subr.bf16.mxu0 0
    %445 = vmatpush1.bf16.msra.mxu0 0
    %446 = vmatprep.subr.bf16.mxu0 0
    %447 = vmatpush1.bf16.msra.mxu0 0
    %448 = vmatprep.subr.bf16.mxu0 0
    %449 = vmatpush1.bf16.msra.mxu0 0
    %450 = vmatprep.subr.bf16.mxu0 0
    %451 = vmatpush1.bf16.msra.mxu0 0
    %452 = vmatprep.subr.bf16.mxu0 0
    %453 = vmatpush1.bf16.msra.mxu0 0
    %454 = vmatprep.subr.bf16.mxu0 0
    %455 = vmatpush1.bf16.msra.mxu0 0
    %456 = vmatprep.mubr.bf16.mxu0 0
    %457 = vmatmul.mubr.bf16.gmra.mrb[0].mxu0 %v422
    %v458 = vpop.f32.mrb[0].mxu0
    %v459 = vadd.f32 %v184, %v458
    %v460 = vpop.f32.mrb[0].mxu0
    %v461 = vadd.f32 %v188, %v460
    %v462 = vpop.f32.mrb[0].mxu0
    %v463 = vpop.f32.mrb[0].mxu0
    %464 = vdwg.mxu0
    %465 = vmatprep.subr.bf16.mxu0 %v360
    %466 = vmatpush1.bf16.msra.mxu0 %v359
    %467 = vmatprep.subr.bf16.mxu0 %v376
    %468 = vmatpush1.bf16.msra.mxu0 %v375
    %469 = vmatprep.subr.bf16.mxu0 0
    %470 = vmatpush1.bf16.msra.mxu0 0
    %471 = vmatprep.subr.bf16.mxu0 0
    %472 = vmatpush1.bf16.msra.mxu0 0
    %473 = vmatprep.subr.bf16.mxu0 0
    %474 = vmatpush1.bf16.msra.mxu0 0
    %475 = vmatprep.subr.bf16.mxu0 0
    %476 = vmatpush1.bf16.msra.mxu0 0
    %477 = vmatprep.subr.bf16.mxu0 0
    %478 = vmatpush1.bf16.msra.mxu0 0
    %479 = vmatprep.subr.bf16.mxu0 0
    %480 = vmatpush1.bf16.msra.mxu0 0
    %481 = vmatprep.subr.bf16.mxu0 0
    %482 = vmatpush1.bf16.msra.mxu0 0
    %483 = vmatprep.subr.bf16.mxu0 0
    %484 = vmatpush1.bf16.msra.mxu0 0
    %485 = vmatprep.subr.bf16.mxu0 0
    %486 = vmatpush1.bf16.msra.mxu0 0
    %487 = vmatprep.subr.bf16.mxu0 0
    %488 = vmatpush1.bf16.msra.mxu0 0
    %489 = vmatprep.subr.bf16.mxu0 0
    %490 = vmatpush1.bf16.msra.mxu0 0
    %491 = vmatprep.subr.bf16.mxu0 0
    %492 = vmatpush1.bf16.msra.mxu0 0
    %493 = vmatprep.subr.bf16.mxu0 0
    %494 = vmatpush1.bf16.msra.mxu0 0
    %495 = vmatprep.subr.bf16.mxu0 0
    %496 = vmatpush1.bf16.msra.mxu0 0
    %497 = vmatprep.mubr.bf16.mxu0 0
    %498 = vmatmul.mubr.bf16.gmra.mrb[0].mxu0 %v422
    %v499 = vpop.f32.mrb[0].mxu0
    %v500 = vadd.f32 %v192, %v499
    %v501 = vpop.f32.mrb[0].mxu0
    %v502 = vadd.f32 %v196, %v501
    %v503 = vpop.f32.mrb[0].mxu0
    %v504 = vpop.f32.mrb[0].mxu0
    %505 = vdwg.mxu0
    %506 = vmatprep.subr.bf16.mxu0 %v362
    %507 = vmatpush1.bf16.msra.mxu0 %v361
    %508 = vmatprep.subr.bf16.mxu0 %v378
    %509 = vmatpush1.bf16.msra.mxu0 %v377
    %510 = vmatprep.subr.bf16.mxu0 0
    %511 = vmatpush1.bf16.msra.mxu0 0
    %512 = vmatprep.subr.bf16.mxu0 0
    %513 = vmatpush1.bf16.msra.mxu0 0
    %514 = vmatprep.subr.bf16.mxu0 0
    %515 = vmatpush1.bf16.msra.mxu0 0
    %516 = vmatprep.subr.bf16.mxu0 0
    %517 = vmatpush1.bf16.msra.mxu0 0
    %518 = vmatprep.subr.bf16.mxu0 0
    %519 = vmatpush1.bf16.msra.mxu0 0
    %520 = vmatprep.subr.bf16.mxu0 0
    %521 = vmatpush1.bf16.msra.mxu0 0
    %522 = vmatprep.subr.bf16.mxu0 0
    %523 = vmatpush1.bf16.msra.mxu0 0
    %524 = vmatprep.subr.bf16.mxu0 0
    %525 = vmatpush1.bf16.msra.mxu0 0
    %526 = vmatprep.subr.bf16.mxu0 0
    %527 = vmatpush1.bf16.msra.mxu0 0
    %528 = vmatprep.subr.bf16.mxu0 0
    %529 = vmatpush1.bf16.msra.mxu0 0
    %530 = vmatprep.subr.bf16.mxu0 0
    %531 = vmatpush1.bf16.msra.mxu0 0
    %532 = vmatprep.subr.bf16.mxu0 0
    %533 = vmatpush1.bf16.msra.mxu0 0
    %534 = vmatprep.subr.bf16.mxu0 0
    %535 = vmatpush1.bf16.msra.mxu0 0
    %536 = vmatprep.subr.bf16.mxu0 0
    %537 = vmatpush1.bf16.msra.mxu0 0
    %538 = vmatprep.mubr.bf16.mxu0 0
    %539 = vmatmul.mubr.bf16.gmra.mrb[0].mxu0 %v422
    %v540 = vpop.f32.mrb[0].mxu0
    %v541 = vadd.f32 %v200, %v540
    %v542 = vpop.f32.mrb[0].mxu0
    %v543 = vadd.f32 %v204, %v542
    %v544 = vpop.f32.mrb[0].mxu0
    %v545 = vpop.f32.mrb[0].mxu0
    %546 = vdwg.mxu0
    %547 = vmatprep.subr.bf16.mxu0 %v364
    %548 = vmatpush1.bf16.msra.mxu0 %v363
    %549 = vmatprep.subr.bf16.mxu0 %v380
    %550 = vmatpush1.bf16.msra.mxu0 %v379
    %551 = vmatprep.subr.bf16.mxu0 0
    %552 = vmatpush1.bf16.msra.mxu0 0
    %553 = vmatprep.subr.bf16.mxu0 0
    %554 = vmatpush1.bf16.msra.mxu0 0
    %555 = vmatprep.subr.bf16.mxu0 0
    %556 = vmatpush1.bf16.msra.mxu0 0
    %557 = vmatprep.subr.bf16.mxu0 0
    %558 = vmatpush1.bf16.msra.mxu0 0
    %559 = vmatprep.subr.bf16.mxu0 0
    %560 = vmatpush1.bf16.msra.mxu0 0
    %561 = vmatprep.subr.bf16.mxu0 0
    %562 = vmatpush1.bf16.msra.mxu0 0
    %563 = vmatprep.subr.bf16.mxu0 0
    %564 = vmatpush1.bf16.msra.mxu0 0
    %565 = vmatprep.subr.bf16.mxu0 0
    %566 = vmatpush1.bf16.msra.mxu0 0
    %567 = vmatprep.subr.bf16.mxu0 0
    %568 = vmatpush1.bf16.msra.mxu0 0
    %569 = vmatprep.subr.bf16.mxu0 0
    %570 = vmatpush1.bf16.msra.mxu0 0
    %571 = vmatprep.subr.bf16.mxu0 0
    %572 = vmatpush1.bf16.msra.mxu0 0
    %573 = vmatprep.subr.bf16.mxu0 0
    %574 = vmatpush1.bf16.msra.mxu0 0
    %575 = vmatprep.subr.bf16.mxu0 0
    %576 = vmatpush1.bf16.msra.mxu0 0
    %577 = vmatprep.subr.bf16.mxu0 0
    %578 = vmatpush1.bf16.msra.mxu0 0
    %579 = vmatprep.mubr.bf16.mxu0 0
    %580 = vmatmul.mubr.bf16.gmra.mrb[0].mxu0 %v422
    %v581 = vpop.f32.mrb[0].mxu0
    %v582 = vadd.f32 %v208, %v581
    %v583 = vpop.f32.mrb[0].mxu0
    %v584 = vadd.f32 %v212, %v583
    %v585 = vpop.f32.mrb[0].mxu0
    %v586 = vpop.f32.mrb[0].mxu0
    %587 = vdwg.mxu0
    %588 = vmatprep.subr.bf16.mxu0 %v366
    %589 = vmatpush1.bf16.msra.mxu0 %v365
    %590 = vmatprep.subr.bf16.mxu0 %v382
    %591 = vmatpush1.bf16.msra.mxu0 %v381
    %592 = vmatprep.subr.bf16.mxu0 0
    %593 = vmatpush1.bf16.msra.mxu0 0
    %594 = vmatprep.subr.bf16.mxu0 0
    %595 = vmatpush1.bf16.msra.mxu0 0
    %596 = vmatprep.subr.bf16.mxu0 0
    %597 = vmatpush1.bf16.msra.mxu0 0
    %598 = vmatprep.subr.bf16.mxu0 0
    %599 = vmatpush1.bf16.msra.mxu0 0
    %600 = vmatprep.subr.bf16.mxu0 0
    %601 = vmatpush1.bf16.msra.mxu0 0
    %602 = vmatprep.subr.bf16.mxu0 0
    %603 = vmatpush1.bf16.msra.mxu0 0
    %604 = vmatprep.subr.bf16.mxu0 0
    %605 = vmatpush1.bf16.msra.mxu0 0
    %606 = vmatprep.subr.bf16.mxu0 0
    %607 = vmatpush1.bf16.msra.mxu0 0
    %608 = vmatprep.subr.bf16.mxu0 0
    %609 = vmatpush1.bf16.msra.mxu0 0
    %610 = vmatprep.subr.bf16.mxu0 0
    %611 = vmatpush1.bf16.msra.mxu0 0
    %612 = vmatprep.subr.bf16.mxu0 0
    %613 = vmatpush1.bf16.msra.mxu0 0
    %614 = vmatprep.subr.bf16.mxu0 0
    %615 = vmatpush1.bf16.msra.mxu0 0
    %616 = vmatprep.subr.bf16.mxu0 0
    %617 = vmatpush1.bf16.msra.mxu0 0
    %618 = vmatprep.subr.bf16.mxu0 0
    %619 = vmatpush1.bf16.msra.mxu0 0
    %620 = vmatprep.mubr.bf16.mxu0 0
    %621 = vmatmul.mubr.bf16.gmra.mrb[0].mxu0 %v422
    %v622 = vpop.f32.mrb[0].mxu0
    %v623 = vadd.f32 %v216, %v622
    %v624 = vpop.f32.mrb[0].mxu0
    %v625 = vadd.f32 %v220, %v624
    %v626 = vpop.f32.mrb[0].mxu0
    %v627 = vpop.f32.mrb[0].mxu0
    %628 = vdwg.mxu0
    %629 = vmatprep.subr.bf16.mxu0 %v368
    %630 = vmatpush1.bf16.msra.mxu0 %v367
    %631 = vmatprep.subr.bf16.mxu0 %v384
    %632 = vmatpush1.bf16.msra.mxu0 %v383
    %633 = vmatprep.subr.bf16.mxu0 0
    %634 = vmatpush1.bf16.msra.mxu0 0
    %635 = vmatprep.subr.bf16.mxu0 0
    %636 = vmatpush1.bf16.msra.mxu0 0
    %637 = vmatprep.subr.bf16.mxu0 0
    %638 = vmatpush1.bf16.msra.mxu0 0
    %639 = vmatprep.subr.bf16.mxu0 0
    %640 = vmatpush1.bf16.msra.mxu0 0
    %641 = vmatprep.subr.bf16.mxu0 0
    %642 = vmatpush1.bf16.msra.mxu0 0
    %643 = vmatprep.subr.bf16.mxu0 0
    %644 = vmatpush1.bf16.msra.mxu0 0
    %645 = vmatprep.subr.bf16.mxu0 0
    %646 = vmatpush1.bf16.msra.mxu0 0
    %647 = vmatprep.subr.bf16.mxu0 0
    %648 = vmatpush1.bf16.msra.mxu0 0
    %649 = vmatprep.subr.bf16.mxu0 0
    %650 = vmatpush1.bf16.msra.mxu0 0
    %651 = vmatprep.subr.bf16.mxu0 0
    %652 = vmatpush1.bf16.msra.mxu0 0
    %653 = vmatprep.subr.bf16.mxu0 0
    %654 = vmatpush1.bf16.msra.mxu0 0
    %655 = vmatprep.subr.bf16.mxu0 0
    %656 = vmatpush1.bf16.msra.mxu0 0
    %657 = vmatprep.subr.bf16.mxu0 0
    %658 = vmatpush1.bf16.msra.mxu0 0
    %659 = vmatprep.subr.bf16.mxu0 0
    %660 = vmatpush1.bf16.msra.mxu0 0
    %661 = vmatprep.mubr.bf16.mxu0 0
    %662 = vmatmul.mubr.bf16.gmra.mrb[0].mxu0 %v422
    %v663 = vpop.f32.mrb[0].mxu0
    %v664 = vadd.f32 %v224, %v663
    %v665 = vpop.f32.mrb[0].mxu0
    %v666 = vadd.f32 %v228, %v665
    %v667 = vpop.f32.mrb[0].mxu0
    %v668 = vpop.f32.mrb[0].mxu0
    %669 = vdwg.mxu0
    %670 = vmatprep.subr.bf16.mxu0 %v370
    %671 = vmatpush1.bf16.msra.mxu0 %v369
    %672 = vmatprep.subr.bf16.mxu0 %v386
    %673 = vmatpush1.bf16.msra.mxu0 %v385
    %674 = vmatprep.subr.bf16.mxu0 0
    %675 = vmatpush1.bf16.msra.mxu0 0
    %676 = vmatprep.subr.bf16.mxu0 0
    %677 = vmatpush1.bf16.msra.mxu0 0
    %678 = vmatprep.subr.bf16.mxu0 0
    %679 = vmatpush1.bf16.msra.mxu0 0
    %680 = vmatprep.subr.bf16.mxu0 0
    %681 = vmatpush1.bf16.msra.mxu0 0
    %682 = vmatprep.subr.bf16.mxu0 0
    %683 = vmatpush1.bf16.msra.mxu0 0
    %684 = vmatprep.subr.bf16.mxu0 0
    %685 = vmatpush1.bf16.msra.mxu0 0
    %686 = vmatprep.subr.bf16.mxu0 0
    %687 = vmatpush1.bf16.msra.mxu0 0
    %688 = vmatprep.subr.bf16.mxu0 0
    %689 = vmatpush1.bf16.msra.mxu0 0
    %690 = vmatprep.subr.bf16.mxu0 0
    %691 = vmatpush1.bf16.msra.mxu0 0
    %692 = vmatprep.subr.bf16.mxu0 0
    %693 = vmatpush1.bf16.msra.mxu0 0
    %694 = vmatprep.subr.bf16.mxu0 0
    %695 = vmatpush1.bf16.msra.mxu0 0
    %696 = vmatprep.subr.bf16.mxu0 0
    %697 = vmatpush1.bf16.msra.mxu0 0
    %698 = vmatprep.subr.bf16.mxu0 0
    %699 = vmatpush1.bf16.msra.mxu0 0
    %700 = vmatprep.subr.bf16.mxu0 0
    %701 = vmatpush1.bf16.msra.mxu0 0
    %702 = vmatprep.mubr.bf16.mxu0 0
    %703 = vmatmul.mubr.bf16.gmra.mrb[0].mxu0 %v422
    %v704 = vpop.f32.mrb[0].mxu0
    %v705 = vadd.f32 %v232, %v704
    %v706 = vpop.f32.mrb[0].mxu0
    %v707 = vadd.f32 %v236, %v706
    %v708 = vpop.f32.mrb[0].mxu0
    %v709 = vpop.f32.mrb[0].mxu0
    %710 = vdwg.mxu0
    %711 = vmatprep.subr.bf16.mxu0 %v372
    %712 = vmatpush1.bf16.msra.mxu0 %v371
    %713 = vmatprep.subr.bf16.mxu0 %v388
    %714 = vmatpush1.bf16.msra.mxu0 %v387
    %715 = vmatprep.subr.bf16.mxu0 0
    %716 = vmatpush1.bf16.msra.mxu0 0
    %717 = vmatprep.subr.bf16.mxu0 0
    %718 = vmatpush1.bf16.msra.mxu0 0
    %719 = vmatprep.subr.bf16.mxu0 0
    %720 = vmatpush1.bf16.msra.mxu0 0
    %721 = vmatprep.subr.bf16.mxu0 0
    %722 = vmatpush1.bf16.msra.mxu0 0
    %723 = vmatprep.subr.bf16.mxu0 0
    %724 = vmatpush1.bf16.msra.mxu0 0
    %725 = vmatprep.subr.bf16.mxu0 0
    %726 = vmatpush1.bf16.msra.mxu0 0
    %727 = vmatprep.subr.bf16.mxu0 0
    %728 = vmatpush1.bf16.msra.mxu0 0
    %729 = vmatprep.subr.bf16.mxu0 0
    %730 = vmatpush1.bf16.msra.mxu0 0
    %731 = vmatprep.subr.bf16.mxu0 0
    %732 = vmatpush1.bf16.msra.mxu0 0
    %733 = vmatprep.subr.bf16.mxu0 0
    %734 = vmatpush1.bf16.msra.mxu0 0
    %735 = vmatprep.subr.bf16.mxu0 0
    %736 = vmatpush1.bf16.msra.mxu0 0
    %737 = vmatprep.subr.bf16.mxu0 0
    %738 = vmatpush1.bf16.msra.mxu0 0
    %739 = vmatprep.subr.bf16.mxu0 0
    %740 = vmatpush1.bf16.msra.mxu0 0
    %741 = vmatprep.subr.bf16.mxu0 0
    %742 = vmatpush1.bf16.msra.mxu0 0
    %743 = vmatprep.mubr.bf16.mxu0 0
    %744 = vmatmul.mubr.bf16.gmra.mrb[0].mxu0 %v422
    %v745 = vpop.f32.mrb[0].mxu0
    %v746 = vadd.f32 %v240, %v745
    %v747 = vpop.f32.mrb[0].mxu0
    %v748 = vadd.f32 %v244, %v747
    %v749 = vpop.f32.mrb[0].mxu0
    %v750 = vpop.f32.mrb[0].mxu0
    %751 = vdwg.mxu0
    %v752 = vmax.f32 %v459, 0.0
    %v753 = vmax.f32 %v461, 0.0
    %v754 = vmax.f32 %v500, 0.0
    %v755 = vmax.f32 %v502, 0.0
    %v756 = vmax.f32 %v541, 0.0
    %v757 = vmax.f32 %v543, 0.0
    %v758 = vmax.f32 %v582, 0.0
    %v759 = vmax.f32 %v584, 0.0
    %v760 = vmax.f32 %v623, 0.0
    %v761 = vmax.f32 %v625, 0.0
    %v762 = vmax.f32 %v664, 0.0
    %v763 = vmax.f32 %v666, 0.0
    %v764 = vmax.f32 %v705, 0.0
    %v765 = vmax.f32 %v707, 0.0
    %v766 = vmax.f32 %v746, 0.0
    %v767 = vmax.f32 %v748, 0.0
    %v768 = vpack.c.bf16 %v752, %v752
    %v769 = vpack.c.bf16 %v753, %v753
    %v770 = vpack.c.bf16 %v754, %v754
    %v771 = vpack.c.bf16 %v755, %v755
    %v772 = vpack.c.bf16 %v756, %v756
    %v773 = vpack.c.bf16 %v757, %v757
    %v774 = vpack.c.bf16 %v758, %v758
    %v775 = vpack.c.bf16 %v759, %v759
    %v776 = vpack.c.bf16 %v760, %v760
    %v777 = vpack.c.bf16 %v761, %v761
    %v778 = vpack.c.bf16 %v762, %v762
    %v779 = vpack.c.bf16 %v763, %v763
    %v780 = vpack.c.bf16 %v764, %v764
    %v781 = vpack.c.bf16 %v765, %v765
    %v782 = vpack.c.bf16 %v766, %v766
    %v783 = vpack.c.bf16 %v767, %v767
    %v784 = vld [vmem:[%s7] sm:$0xf]
    %v785 = vld [vmem:[%s7 + $0x4] sm:$0xf]
    %v786 = vld [vmem:[%s7 + $0x8] sm:$0xf]
    %v787 = vld [vmem:[%s7 + $0xc] sm:$0xf]
    %v788 = vld [vmem:[%s7 + $0x10] sm:$0xf]
    %v789 = vld [vmem:[%s7 + $0x14] sm:$0xf]
    %v790 = vld [vmem:[%s7 + $0x18] sm:$0xf]
    %v791 = vld [vmem:[%s7 + $0x1c] sm:$0xf]
    %v792 = vld [vmem:[%s7 + $0x20] sm:$0xf]
    %v793 = vld [vmem:[%s7 + $0x24] sm:$0xf]
    %v794 = vld [vmem:[%s7 + $0x28] sm:$0xf]
    %v795 = vld [vmem:[%s7 + $0x2c] sm:$0xf]
    %v796 = vld [vmem:[%s7 + $0x30] sm:$0xf]
    %v797 = vld [vmem:[%s7 + $0x34] sm:$0xf]
    %v798 = vld [vmem:[%s7 + $0x38] sm:$0xf]
    %v799 = vld [vmem:[%s7 + $0x3c] sm:$0xf]
    %v800 = vld [vmem:[%s7 + $0x40] sm:$0xf]
    %v801 = vld [vmem:[%s7 + $0x44] sm:$0xf]
    %v802 = vld [vmem:[%s7 + $0x48] sm:$0xf]
    %v803 = vld [vmem:[%s7 + $0x4c] sm:$0xf]
    %v804 = vld [vmem:[%s7 + $0x50] sm:$0xf]
    %v805 = vld [vmem:[%s7 + $0x54] sm:$0xf]
    %v806 = vld [vmem:[%s7 + $0x58] sm:$0xf]
    %v807 = vld [vmem:[%s7 + $0x5c] sm:$0xf]
    %v808 = vld [vmem:[%s7 + $0x60] sm:$0xf]
    %v809 = vld [vmem:[%s7 + $0x64] sm:$0xf]
    %v810 = vld [vmem:[%s7 + $0x68] sm:$0xf]
    %v811 = vld [vmem:[%s7 + $0x6c] sm:$0xf]
    %v812 = vld [vmem:[%s7 + $0x70] sm:$0xf]
    %v813 = vld [vmem:[%s7 + $0x74] sm:$0xf]
    %v814 = vld [vmem:[%s7 + $0x78] sm:$0xf]
    %v815 = vld [vmem:[%s7 + $0x7c] sm:$0xf]
    %v816 = vld [vmem:[%s7 + $0x80] sm:$0xf]
    %v817 = vld [vmem:[%s7 + $0x84] sm:$0xf]
    %v818 = vld [vmem:[%s7 + $0x88] sm:$0xf]
    %v819 = vld [vmem:[%s7 + $0x8c] sm:$0xf]
    %v820 = vld [vmem:[%s7 + $0x90] sm:$0xf]
    %v821 = vld [vmem:[%s7 + $0x94] sm:$0xf]
    %v822 = vld [vmem:[%s7 + $0x98] sm:$0xf]
    %v823 = vld [vmem:[%s7 + $0x9c] sm:$0xf]
    %v824 = vld [vmem:[%s7 + $0xa0] sm:$0xf]
    %v825 = vld [vmem:[%s7 + $0xa4] sm:$0xf]
    %v826 = vld [vmem:[%s7 + $0xa8] sm:$0xf]
    %v827 = vld [vmem:[%s7 + $0xac] sm:$0xf]
    %v828 = vld [vmem:[%s7 + $0xb0] sm:$0xf]
    %v829 = vld [vmem:[%s7 + $0xb4] sm:$0xf]
    %v830 = vld [vmem:[%s7 + $0xb8] sm:$0xf]
    %v831 = vld [vmem:[%s7 + $0xbc] sm:$0xf]
    %v832 = vld [vmem:[%s7 + $0xc0] sm:$0xf]
    %v833 = vld [vmem:[%s7 + $0xc4] sm:$0xf]
    %v834 = vld [vmem:[%s7 + $0xc8] sm:$0xf]
    %v835 = vld [vmem:[%s7 + $0xcc] sm:$0xf]
    %v836 = vld [vmem:[%s7 + $0xd0] sm:$0xf]
    %v837 = vld [vmem:[%s7 + $0xd4] sm:$0xf]
    %v838 = vld [vmem:[%s7 + $0xd8] sm:$0xf]
    %v839 = vld [vmem:[%s7 + $0xdc] sm:$0xf]
    %v840 = vld [vmem:[%s7 + $0xe0] sm:$0xf]
    %v841 = vld [vmem:[%s7 + $0xe4] sm:$0xf]
    %v842 = vld [vmem:[%s7 + $0xe8] sm:$0xf]
    %v843 = vld [vmem:[%s7 + $0xec] sm:$0xf]
    %v844 = vld [vmem:[%s7 + $0xf0] sm:$0xf]
    %v845 = vld [vmem:[%s7 + $0xf4] sm:$0xf]
    %v846 = vld [vmem:[%s7 + $0xf8] sm:$0xf]
    %v847 = vld [vmem:[%s7 + $0xfc] sm:$0xf]
    %v848 = vld [vmem:[%s7 + $0x100] sm:$0xf]
    %v849 = vld [vmem:[%s7 + $0x104] sm:$0xf]
    %v850 = vld [vmem:[%s7 + $0x108] sm:$0xf]
    %v851 = vld [vmem:[%s7 + $0x10c] sm:$0xf]
    %v852 = vld [vmem:[%s7 + $0x110] sm:$0xf]
    %v853 = vld [vmem:[%s7 + $0x114] sm:$0xf]
    %v854 = vld [vmem:[%s7 + $0x118] sm:$0xf]
    %v855 = vld [vmem:[%s7 + $0x11c] sm:$0xf]
    %v856 = vld [vmem:[%s7 + $0x120] sm:$0xf]
    %v857 = vld [vmem:[%s7 + $0x124] sm:$0xf]
    %v858 = vld [vmem:[%s7 + $0x128] sm:$0xf]
    %v859 = vld [vmem:[%s7 + $0x12c] sm:$0xf]
    %v860 = vld [vmem:[%s7 + $0x130] sm:$0xf]
    %v861 = vld [vmem:[%s7 + $0x134] sm:$0xf]
    %v862 = vld [vmem:[%s7 + $0x138] sm:$0xf]
    %v863 = vld [vmem:[%s7 + $0x13c] sm:$0xf]
    %v864 = vld [vmem:[%s7 + $0x140] sm:$0xf]
    %v865 = vld [vmem:[%s7 + $0x144] sm:$0xf]
    %v866 = vld [vmem:[%s7 + $0x148] sm:$0xf]
    %v867 = vld [vmem:[%s7 + $0x14c] sm:$0xf]
    %v868 = vld [vmem:[%s7 + $0x150] sm:$0xf]
    %v869 = vld [vmem:[%s7 + $0x154] sm:$0xf]
    %v870 = vld [vmem:[%s7 + $0x158] sm:$0xf]
    %v871 = vld [vmem:[%s7 + $0x15c] sm:$0xf]
    %v872 = vld [vmem:[%s7 + $0x160] sm:$0xf]
    %v873 = vld [vmem:[%s7 + $0x164] sm:$0xf]
    %v874 = vld [vmem:[%s7 + $0x168] sm:$0xf]
    %v875 = vld [vmem:[%s7 + $0x16c] sm:$0xf]
    %v876 = vld [vmem:[%s7 + $0x170] sm:$0xf]
    %v877 = vld [vmem:[%s7 + $0x174] sm:$0xf]
    %v878 = vld [vmem:[%s7 + $0x178] sm:$0xf]
    %v879 = vld [vmem:[%s7 + $0x17c] sm:$0xf]
    %v880 = vld [vmem:[%s7 + $0x180] sm:$0xf]
    %v881 = vld [vmem:[%s7 + $0x184] sm:$0xf]
    %v882 = vld [vmem:[%s7 + $0x188] sm:$0xf]
    %v883 = vld [vmem:[%s7 + $0x18c] sm:$0xf]
    %v884 = vld [vmem:[%s7 + $0x190] sm:$0xf]
    %v885 = vld [vmem:[%s7 + $0x194] sm:$0xf]
    %v886 = vld [vmem:[%s7 + $0x198] sm:$0xf]
    %v887 = vld [vmem:[%s7 + $0x19c] sm:$0xf]
    %v888 = vld [vmem:[%s7 + $0x1a0] sm:$0xf]
    %v889 = vld [vmem:[%s7 + $0x1a4] sm:$0xf]
    %v890 = vld [vmem:[%s7 + $0x1a8] sm:$0xf]
    %v891 = vld [vmem:[%s7 + $0x1ac] sm:$0xf]
    %v892 = vld [vmem:[%s7 + $0x1b0] sm:$0xf]
    %v893 = vld [vmem:[%s7 + $0x1b4] sm:$0xf]
    %v894 = vld [vmem:[%s7 + $0x1b8] sm:$0xf]
    %v895 = vld [vmem:[%s7 + $0x1bc] sm:$0xf]
    %v896 = vld [vmem:[%s7 + $0x1c0] sm:$0xf]
    %v897 = vld [vmem:[%s7 + $0x1c4] sm:$0xf]
    %v898 = vld [vmem:[%s7 + $0x1c8] sm:$0xf]
    %v899 = vld [vmem:[%s7 + $0x1cc] sm:$0xf]
    %v900 = vld [vmem:[%s7 + $0x1d0] sm:$0xf]
    %v901 = vld [vmem:[%s7 + $0x1d4] sm:$0xf]
    %v902 = vld [vmem:[%s7 + $0x1d8] sm:$0xf]
    %v903 = vld [vmem:[%s7 + $0x1dc] sm:$0xf]
    %v904 = vld [vmem:[%s7 + $0x1e0] sm:$0xf]
    %v905 = vld [vmem:[%s7 + $0x1e4] sm:$0xf]
    %v906 = vld [vmem:[%s7 + $0x1e8] sm:$0xf]
    %v907 = vld [vmem:[%s7 + $0x1ec] sm:$0xf]
    %v908 = vld [vmem:[%s7 + $0x1f0] sm:$0xf]
    %v909 = vld [vmem:[%s7 + $0x1f4] sm:$0xf]
    %v910 = vld [vmem:[%s7 + $0x1f8] sm:$0xf]
    %v911 = vld [vmem:[%s7 + $0x1fc] sm:$0xf]
    %v912 = vld [vmem:[%s7 + $0x200] sm:$0xf]
    %v913 = vld [vmem:[%s7 + $0x204] sm:$0xf]
    %v914 = vld [vmem:[%s7 + $0x208] sm:$0xf]
    %v915 = vld [vmem:[%s7 + $0x20c] sm:$0xf]
    %v916 = vld [vmem:[%s7 + $0x210] sm:$0xf]
    %v917 = vld [vmem:[%s7 + $0x214] sm:$0xf]
    %v918 = vld [vmem:[%s7 + $0x218] sm:$0xf]
    %v919 = vld [vmem:[%s7 + $0x21c] sm:$0xf]
    %v920 = vld [vmem:[%s7 + $0x220] sm:$0xf]
    %v921 = vld [vmem:[%s7 + $0x224] sm:$0xf]
    %v922 = vld [vmem:[%s7 + $0x228] sm:$0xf]
    %v923 = vld [vmem:[%s7 + $0x22c] sm:$0xf]
    %v924 = vld [vmem:[%s7 + $0x230] sm:$0xf]
    %v925 = vld [vmem:[%s7 + $0x234] sm:$0xf]
    %v926 = vld [vmem:[%s7 + $0x238] sm:$0xf]
    %v927 = vld [vmem:[%s7 + $0x23c] sm:$0xf]
    %v928 = vld [vmem:[%s7 + $0x240] sm:$0xf]
    %v929 = vld [vmem:[%s7 + $0x244] sm:$0xf]
    %v930 = vld [vmem:[%s7 + $0x248] sm:$0xf]
    %v931 = vld [vmem:[%s7 + $0x24c] sm:$0xf]
    %v932 = vld [vmem:[%s7 + $0x250] sm:$0xf]
    %v933 = vld [vmem:[%s7 + $0x254] sm:$0xf]
    %v934 = vld [vmem:[%s7 + $0x258] sm:$0xf]
    %v935 = vld [vmem:[%s7 + $0x25c] sm:$0xf]
    %v936 = vld [vmem:[%s7 + $0x260] sm:$0xf]
    %v937 = vld [vmem:[%s7 + $0x264] sm:$0xf]
    %v938 = vld [vmem:[%s7 + $0x268] sm:$0xf]
    %v939 = vld [vmem:[%s7 + $0x26c] sm:$0xf]
    %v940 = vld [vmem:[%s7 + $0x270] sm:$0xf]
    %v941 = vld [vmem:[%s7 + $0x274] sm:$0xf]
    %v942 = vld [vmem:[%s7 + $0x278] sm:$0xf]
    %v943 = vld [vmem:[%s7 + $0x27c] sm:$0xf]
    %v944 = vld [vmem:[%s7 + $0x280] sm:$0xf]
    %v945 = vld [vmem:[%s7 + $0x284] sm:$0xf]
    %v946 = vld [vmem:[%s7 + $0x288] sm:$0xf]
    %v947 = vld [vmem:[%s7 + $0x28c] sm:$0xf]
    %v948 = vld [vmem:[%s7 + $0x290] sm:$0xf]
    %v949 = vld [vmem:[%s7 + $0x294] sm:$0xf]
    %v950 = vld [vmem:[%s7 + $0x298] sm:$0xf]
    %v951 = vld [vmem:[%s7 + $0x29c] sm:$0xf]
    %v952 = vld [vmem:[%s7 + $0x2a0] sm:$0xf]
    %v953 = vld [vmem:[%s7 + $0x2a4] sm:$0xf]
    %v954 = vld [vmem:[%s7 + $0x2a8] sm:$0xf]
    %v955 = vld [vmem:[%s7 + $0x2ac] sm:$0xf]
    %v956 = vld [vmem:[%s7 + $0x2b0] sm:$0xf]
    %v957 = vld [vmem:[%s7 + $0x2b4] sm:$0xf]
    %v958 = vld [vmem:[%s7 + $0x2b8] sm:$0xf]
    %v959 = vld [vmem:[%s7 + $0x2bc] sm:$0xf]
    %v960 = vld [vmem:[%s7 + $0x2c0] sm:$0xf]
    %v961 = vld [vmem:[%s7 + $0x2c4] sm:$0xf]
    %v962 = vld [vmem:[%s7 + $0x2c8] sm:$0xf]
    %v963 = vld [vmem:[%s7 + $0x2cc] sm:$0xf]
    %v964 = vld [vmem:[%s7 + $0x2d0] sm:$0xf]
    %v965 = vld [vmem:[%s7 + $0x2d4] sm:$0xf]
    %v966 = vld [vmem:[%s7 + $0x2d8] sm:$0xf]
    %v967 = vld [vmem:[%s7 + $0x2dc] sm:$0xf]
    %v968 = vld [vmem:[%s7 + $0x2e0] sm:$0xf]
    %v969 = vld [vmem:[%s7 + $0x2e4] sm:$0xf]
    %v970 = vld [vmem:[%s7 + $0x2e8] sm:$0xf]
    %v971 = vld [vmem:[%s7 + $0x2ec] sm:$0xf]
    %v972 = vld [vmem:[%s7 + $0x2f0] sm:$0xf]
    %v973 = vld [vmem:[%s7 + $0x2f4] sm:$0xf]
    %v974 = vld [vmem:[%s7 + $0x2f8] sm:$0xf]
    %v975 = vld [vmem:[%s7 + $0x2fc] sm:$0xf]
    %v976 = vld [vmem:[%s7 + $0x300] sm:$0xf]
    %v977 = vld [vmem:[%s7 + $0x304] sm:$0xf]
    %v978 = vld [vmem:[%s7 + $0x308] sm:$0xf]
    %v979 = vld [vmem:[%s7 + $0x30c] sm:$0xf]
    %v980 = vld [vmem:[%s7 + $0x310] sm:$0xf]
    %v981 = vld [vmem:[%s7 + $0x314] sm:$0xf]
    %v982 = vld [vmem:[%s7 + $0x318] sm:$0xf]
    %v983 = vld [vmem:[%s7 + $0x31c] sm:$0xf]
    %v984 = vld [vmem:[%s7 + $0x320] sm:$0xf]
    %v985 = vld [vmem:[%s7 + $0x324] sm:$0xf]
    %v986 = vld [vmem:[%s7 + $0x328] sm:$0xf]
    %v987 = vld [vmem:[%s7 + $0x32c] sm:$0xf]
    %v988 = vld [vmem:[%s7 + $0x330] sm:$0xf]
    %v989 = vld [vmem:[%s7 + $0x334] sm:$0xf]
    %v990 = vld [vmem:[%s7 + $0x338] sm:$0xf]
    %v991 = vld [vmem:[%s7 + $0x33c] sm:$0xf]
    %v992 = vld [vmem:[%s7 + $0x340] sm:$0xf]
    %v993 = vld [vmem:[%s7 + $0x344] sm:$0xf]
    %v994 = vld [vmem:[%s7 + $0x348] sm:$0xf]
    %v995 = vld [vmem:[%s7 + $0x34c] sm:$0xf]
    %v996 = vld [vmem:[%s7 + $0x350] sm:$0xf]
    %v997 = vld [vmem:[%s7 + $0x354] sm:$0xf]
    %v998 = vld [vmem:[%s7 + $0x358] sm:$0xf]
    %v999 = vld [vmem:[%s7 + $0x35c] sm:$0xf]
    %v1000 = vld [vmem:[%s7 + $0x360] sm:$0xf]
    %v1001 = vld [vmem:[%s7 + $0x364] sm:$0xf]
    %v1002 = vld [vmem:[%s7 + $0x368] sm:$0xf]
    %v1003 = vld [vmem:[%s7 + $0x36c] sm:$0xf]
    %v1004 = vld [vmem:[%s7 + $0x370] sm:$0xf]
    %v1005 = vld [vmem:[%s7 + $0x374] sm:$0xf]
    %v1006 = vld [vmem:[%s7 + $0x378] sm:$0xf]
    %v1007 = vld [vmem:[%s7 + $0x37c] sm:$0xf]
    %v1008 = vld [vmem:[%s7 + $0x380] sm:$0xf]
    %v1009 = vld [vmem:[%s7 + $0x384] sm:$0xf]
    %v1010 = vld [vmem:[%s7 + $0x388] sm:$0xf]
    %v1011 = vld [vmem:[%s7 + $0x38c] sm:$0xf]
    %v1012 = vld [vmem:[%s7 + $0x390] sm:$0xf]
    %v1013 = vld [vmem:[%s7 + $0x394] sm:$0xf]
    %v1014 = vld [vmem:[%s7 + $0x398] sm:$0xf]
    %v1015 = vld [vmem:[%s7 + $0x39c] sm:$0xf]
    %v1016 = vld [vmem:[%s7 + $0x3a0] sm:$0xf]
    %v1017 = vld [vmem:[%s7 + $0x3a4] sm:$0xf]
    %v1018 = vld [vmem:[%s7 + $0x3a8] sm:$0xf]
    %v1019 = vld [vmem:[%s7 + $0x3ac] sm:$0xf]
    %v1020 = vld [vmem:[%s7 + $0x3b0] sm:$0xf]
    %v1021 = vld [vmem:[%s7 + $0x3b4] sm:$0xf]
    %v1022 = vld [vmem:[%s7 + $0x3b8] sm:$0xf]
    %v1023 = vld [vmem:[%s7 + $0x3bc] sm:$0xf]
    %v1024 = vld [vmem:[%s7 + $0x3c0] sm:$0xf]
    %v1025 = vld [vmem:[%s7 + $0x3c4] sm:$0xf]
    %v1026 = vld [vmem:[%s7 + $0x3c8] sm:$0xf]
    %v1027 = vld [vmem:[%s7 + $0x3cc] sm:$0xf]
    %v1028 = vld [vmem:[%s7 + $0x3d0] sm:$0xf]
    %v1029 = vld [vmem:[%s7 + $0x3d4] sm:$0xf]
    %v1030 = vld [vmem:[%s7 + $0x3d8] sm:$0xf]
    %v1031 = vld [vmem:[%s7 + $0x3dc] sm:$0xf]
    %v1032 = vld [vmem:[%s7 + $0x3e0] sm:$0xf]
    %v1033 = vld [vmem:[%s7 + $0x3e4] sm:$0xf]
    %v1034 = vld [vmem:[%s7 + $0x3e8] sm:$0xf]
    %v1035 = vld [vmem:[%s7 + $0x3ec] sm:$0xf]
    %v1036 = vld [vmem:[%s7 + $0x3f0] sm:$0xf]
    %v1037 = vld [vmem:[%s7 + $0x3f4] sm:$0xf]
    %v1038 = vld [vmem:[%s7 + $0x3f8] sm:$0xf]
    %v1039 = vld [vmem:[%s7 + $0x3fc] sm:$0xf]
    %v1040 = vld [vmem:[%s8] sm:$0x1]
    %v1042 = vlaneseq
    %v1043 = vshrl.u32 %v1042, 7
    %v1044 = vsub.s32 0, %v1043
    %v1045 = vrot.slane %v1040, %v1044
    %v1303 = vunpack.c.l.b16 %v784
    %v1304 = vunpack.c.l.b16 %v785
    %v1305 = vunpack.c.l.b16 %v786
    %v1306 = vunpack.c.l.b16 %v787
    %v1307 = vunpack.c.l.b16 %v788
    %v1308 = vunpack.c.l.b16 %v789
    %v1309 = vunpack.c.l.b16 %v790
    %v1310 = vunpack.c.l.b16 %v791
    %v1311 = vunpack.c.l.b16 %v792
    %v1312 = vunpack.c.l.b16 %v793
    %v1313 = vunpack.c.l.b16 %v794
    %v1314 = vunpack.c.l.b16 %v795
    %v1315 = vunpack.c.l.b16 %v796
    %v1316 = vunpack.c.l.b16 %v797
    %v1317 = vunpack.c.l.b16 %v798
    %v1318 = vunpack.c.l.b16 %v799
    %v1319 = vunpack.c.l.b16 %v800
    %v1320 = vunpack.c.l.b16 %v801
    %v1321 = vunpack.c.l.b16 %v802
    %v1322 = vunpack.c.l.b16 %v803
    %v1323 = vunpack.c.l.b16 %v804
    %v1324 = vunpack.c.l.b16 %v805
    %v1325 = vunpack.c.l.b16 %v806
    %v1326 = vunpack.c.l.b16 %v807
    %v1327 = vunpack.c.l.b16 %v808
    %v1328 = vunpack.c.l.b16 %v809
    %v1329 = vunpack.c.l.b16 %v810
    %v1330 = vunpack.c.l.b16 %v811
    %v1331 = vunpack.c.l.b16 %v812
    %v1332 = vunpack.c.l.b16 %v813
    %v1333 = vunpack.c.l.b16 %v814
    %v1334 = vunpack.c.l.b16 %v815
    %v1335 = vunpack.c.l.b16 %v816
    %v1336 = vunpack.c.l.b16 %v817
    %v1337 = vunpack.c.l.b16 %v818
    %v1338 = vunpack.c.l.b16 %v819
    %v1339 = vunpack.c.l.b16 %v820
    %v1340 = vunpack.c.l.b16 %v821
    %v1341 = vunpack.c.l.b16 %v822
    %v1342 = vunpack.c.l.b16 %v823
    %v1343 = vunpack.c.l.b16 %v824
    %v1344 = vunpack.c.l.b16 %v825
    %v1345 = vunpack.c.l.b16 %v826
    %v1346 = vunpack.c.l.b16 %v827
    %v1347 = vunpack.c.l.b16 %v828
    %v1348 = vunpack.c.l.b16 %v829
    %v1349 = vunpack.c.l.b16 %v830
    %v1350 = vunpack.c.l.b16 %v831
    %v1351 = vunpack.c.l.b16 %v832
    %v1352 = vunpack.c.l.b16 %v833
    %v1353 = vunpack.c.l.b16 %v834
    %v1354 = vunpack.c.l.b16 %v835
    %v1355 = vunpack.c.l.b16 %v836
    %v1356 = vunpack.c.l.b16 %v837
    %v1357 = vunpack.c.l.b16 %v838
    %v1358 = vunpack.c.l.b16 %v839
    %v1359 = vunpack.c.l.b16 %v840
    %v1360 = vunpack.c.l.b16 %v841
    %v1361 = vunpack.c.l.b16 %v842
    %v1362 = vunpack.c.l.b16 %v843
    %v1363 = vunpack.c.l.b16 %v844
    %v1364 = vunpack.c.l.b16 %v845
    %v1365 = vunpack.c.l.b16 %v846
    %v1366 = vunpack.c.l.b16 %v847
    %v1367 = vunpack.c.l.b16 %v848
    %v1368 = vunpack.c.l.b16 %v849
    %v1369 = vunpack.c.l.b16 %v850
    %v1370 = vunpack.c.l.b16 %v851
    %v1371 = vunpack.c.l.b16 %v852
    %v1372 = vunpack.c.l.b16 %v853
    %v1373 = vunpack.c.l.b16 %v854
    %v1374 = vunpack.c.l.b16 %v855
    %v1375 = vunpack.c.l.b16 %v856
    %v1376 = vunpack.c.l.b16 %v857
    %v1377 = vunpack.c.l.b16 %v858
    %v1378 = vunpack.c.l.b16 %v859
    %v1379 = vunpack.c.l.b16 %v860
    %v1380 = vunpack.c.l.b16 %v861
    %v1381 = vunpack.c.l.b16 %v862
    %v1382 = vunpack.c.l.b16 %v863
    %v1383 = vunpack.c.l.b16 %v864
    %v1384 = vunpack.c.l.b16 %v865
    %v1385 = vunpack.c.l.b16 %v866
    %v1386 = vunpack.c.l.b16 %v867
    %v1387 = vunpack.c.l.b16 %v868
    %v1388 = vunpack.c.l.b16 %v869
    %v1389 = vunpack.c.l.b16 %v870
    %v1390 = vunpack.c.l.b16 %v871
    %v1391 = vunpack.c.l.b16 %v872
    %v1392 = vunpack.c.l.b16 %v873
    %v1393 = vunpack.c.l.b16 %v874
    %v1394 = vunpack.c.l.b16 %v875
    %v1395 = vunpack.c.l.b16 %v876
    %v1396 = vunpack.c.l.b16 %v877
    %v1397 = vunpack.c.l.b16 %v878
    %v1398 = vunpack.c.l.b16 %v879
    %v1399 = vunpack.c.l.b16 %v880
    %v1400 = vunpack.c.l.b16 %v881
    %v1401 = vunpack.c.l.b16 %v882
    %v1402 = vunpack.c.l.b16 %v883
    %v1403 = vunpack.c.l.b16 %v884
    %v1404 = vunpack.c.l.b16 %v885
    %v1405 = vunpack.c.l.b16 %v886
    %v1406 = vunpack.c.l.b16 %v887
    %v1407 = vunpack.c.l.b16 %v888
    %v1408 = vunpack.c.l.b16 %v889
    %v1409 = vunpack.c.l.b16 %v890
    %v1410 = vunpack.c.l.b16 %v891
    %v1411 = vunpack.c.l.b16 %v892
    %v1412 = vunpack.c.l.b16 %v893
    %v1413 = vunpack.c.l.b16 %v894
    %v1414 = vunpack.c.l.b16 %v895
    %v1415 = vunpack.c.l.b16 %v896
    %v1416 = vunpack.c.l.b16 %v897
    %v1417 = vunpack.c.l.b16 %v898
    %v1418 = vunpack.c.l.b16 %v899
    %v1419 = vunpack.c.l.b16 %v900
    %v1420 = vunpack.c.l.b16 %v901
    %v1421 = vunpack.c.l.b16 %v902
    %v1422 = vunpack.c.l.b16 %v903
    %v1423 = vunpack.c.l.b16 %v904
    %v1424 = vunpack.c.l.b16 %v905
    %v1425 = vunpack.c.l.b16 %v906
    %v1426 = vunpack.c.l.b16 %v907
    %v1427 = vunpack.c.l.b16 %v908
    %v1428 = vunpack.c.l.b16 %v909
    %v1429 = vunpack.c.l.b16 %v910
    %v1430 = vunpack.c.l.b16 %v911
    %v1431 = vunpack.c.l.b16 %v912
    %v1432 = vunpack.c.l.b16 %v913
    %v1433 = vunpack.c.l.b16 %v914
    %v1434 = vunpack.c.l.b16 %v915
    %v1435 = vunpack.c.l.b16 %v916
    %v1436 = vunpack.c.l.b16 %v917
    %v1437 = vunpack.c.l.b16 %v918
    %v1438 = vunpack.c.l.b16 %v919
    %v1439 = vunpack.c.l.b16 %v920
    %v1440 = vunpack.c.l.b16 %v921
    %v1441 = vunpack.c.l.b16 %v922
    %v1442 = vunpack.c.l.b16 %v923
    %v1443 = vunpack.c.l.b16 %v924
    %v1444 = vunpack.c.l.b16 %v925
    %v1445 = vunpack.c.l.b16 %v926
    %v1446 = vunpack.c.l.b16 %v927
    %v1447 = vunpack.c.l.b16 %v928
    %v1448 = vunpack.c.l.b16 %v929
    %v1449 = vunpack.c.l.b16 %v930
    %v1450 = vunpack.c.l.b16 %v931
    %v1451 = vunpack.c.l.b16 %v932
    %v1452 = vunpack.c.l.b16 %v933
    %v1453 = vunpack.c.l.b16 %v934
    %v1454 = vunpack.c.l.b16 %v935
    %v1455 = vunpack.c.l.b16 %v936
    %v1456 = vunpack.c.l.b16 %v937
    %v1457 = vunpack.c.l.b16 %v938
    %v1458 = vunpack.c.l.b16 %v939
    %v1459 = vunpack.c.l.b16 %v940
    %v1460 = vunpack.c.l.b16 %v941
    %v1461 = vunpack.c.l.b16 %v942
    %v1462 = vunpack.c.l.b16 %v943
    %v1463 = vunpack.c.l.b16 %v944
    %v1464 = vunpack.c.l.b16 %v945
    %v1465 = vunpack.c.l.b16 %v946
    %v1466 = vunpack.c.l.b16 %v947
    %v1467 = vunpack.c.l.b16 %v948
    %v1468 = vunpack.c.l.b16 %v949
    %v1469 = vunpack.c.l.b16 %v950
    %v1470 = vunpack.c.l.b16 %v951
    %v1471 = vunpack.c.l.b16 %v952
    %v1472 = vunpack.c.l.b16 %v953
    %v1473 = vunpack.c.l.b16 %v954
    %v1474 = vunpack.c.l.b16 %v955
    %v1475 = vunpack.c.l.b16 %v956
    %v1476 = vunpack.c.l.b16 %v957
    %v1477 = vunpack.c.l.b16 %v958
    %v1478 = vunpack.c.l.b16 %v959
    %v1479 = vunpack.c.l.b16 %v960
    %v1480 = vunpack.c.l.b16 %v961
    %v1481 = vunpack.c.l.b16 %v962
    %v1482 = vunpack.c.l.b16 %v963
    %v1483 = vunpack.c.l.b16 %v964
    %v1484 = vunpack.c.l.b16 %v965
    %v1485 = vunpack.c.l.b16 %v966
    %v1486 = vunpack.c.l.b16 %v967
    %v1487 = vunpack.c.l.b16 %v968
    %v1488 = vunpack.c.l.b16 %v969
    %v1489 = vunpack.c.l.b16 %v970
    %v1490 = vunpack.c.l.b16 %v971
    %v1491 = vunpack.c.l.b16 %v972
    %v1492 = vunpack.c.l.b16 %v973
    %v1493 = vunpack.c.l.b16 %v974
    %v1494 = vunpack.c.l.b16 %v975
    %v1495 = vunpack.c.l.b16 %v976
    %v1496 = vunpack.c.l.b16 %v977
    %v1497 = vunpack.c.l.b16 %v978
    %v1498 = vunpack.c.l.b16 %v979
    %v1499 = vunpack.c.l.b16 %v980
    %v1500 = vunpack.c.l.b16 %v981
    %v1501 = vunpack.c.l.b16 %v982
    %v1502 = vunpack.c.l.b16 %v983
    %v1503 = vunpack.c.l.b16 %v984
    %v1504 = vunpack.c.l.b16 %v985
    %v1505 = vunpack.c.l.b16 %v986
    %v1506 = vunpack.c.l.b16 %v987
    %v1507 = vunpack.c.l.b16 %v988
    %v1508 = vunpack.c.l.b16 %v989
    %v1509 = vunpack.c.l.b16 %v990
    %v1510 = vunpack.c.l.b16 %v991
    %v1511 = vunpack.c.l.b16 %v992
    %v1512 = vunpack.c.l.b16 %v993
    %v1513 = vunpack.c.l.b16 %v994
    %v1514 = vunpack.c.l.b16 %v995
    %v1515 = vunpack.c.l.b16 %v996
    %v1516 = vunpack.c.l.b16 %v997
    %v1517 = vunpack.c.l.b16 %v998
    %v1518 = vunpack.c.l.b16 %v999
    %v1519 = vunpack.c.l.b16 %v1000
    %v1520 = vunpack.c.l.b16 %v1001
    %v1521 = vunpack.c.l.b16 %v1002
    %v1522 = vunpack.c.l.b16 %v1003
    %v1523 = vunpack.c.l.b16 %v1004
    %v1524 = vunpack.c.l.b16 %v1005
    %v1525 = vunpack.c.l.b16 %v1006
    %v1526 = vunpack.c.l.b16 %v1007
    %v1527 = vunpack.c.l.b16 %v1008
    %v1528 = vunpack.c.l.b16 %v1009
    %v1529 = vunpack.c.l.b16 %v1010
    %v1530 = vunpack.c.l.b16 %v1011
    %v1531 = vunpack.c.l.b16 %v1012
    %v1532 = vunpack.c.l.b16 %v1013
    %v1533 = vunpack.c.l.b16 %v1014
    %v1534 = vunpack.c.l.b16 %v1015
    %v1535 = vunpack.c.l.b16 %v1016
    %v1536 = vunpack.c.l.b16 %v1017
    %v1537 = vunpack.c.l.b16 %v1018
    %v1538 = vunpack.c.l.b16 %v1019
    %v1539 = vunpack.c.l.b16 %v1020
    %v1540 = vunpack.c.l.b16 %v1021
    %v1541 = vunpack.c.l.b16 %v1022
    %v1542 = vunpack.c.l.b16 %v1023
    %v1543 = vunpack.c.l.b16 %v1024
    %v1544 = vunpack.c.l.b16 %v1025
    %v1545 = vunpack.c.l.b16 %v1026
    %v1546 = vunpack.c.l.b16 %v1027
    %v1547 = vunpack.c.l.b16 %v1028
    %v1548 = vunpack.c.l.b16 %v1029
    %v1549 = vunpack.c.l.b16 %v1030
    %v1550 = vunpack.c.l.b16 %v1031
    %v1551 = vunpack.c.l.b16 %v1032
    %v1552 = vunpack.c.l.b16 %v1033
    %v1553 = vunpack.c.l.b16 %v1034
    %v1554 = vunpack.c.l.b16 %v1035
    %v1555 = vunpack.c.l.b16 %v1036
    %v1556 = vunpack.c.l.b16 %v1037
    %v1557 = vunpack.c.l.b16 %v1038
    %v1558 = vunpack.c.l.b16 %v1039
    %v1559 = vpack.c.b16 %v1304, %v1303
    %v1560 = vpack.c.b16 %v1306, %v1305
    %v1561 = vpack.c.b16 %v1308, %v1307
    %v1562 = vpack.c.b16 %v1310, %v1309
    %v1563 = vpack.c.b16 %v1312, %v1311
    %v1564 = vpack.c.b16 %v1314, %v1313
    %v1565 = vpack.c.b16 %v1316, %v1315
    %v1566 = vpack.c.b16 %v1318, %v1317
    %v1567 = vpack.c.b16 %v1320, %v1319
    %v1568 = vpack.c.b16 %v1322, %v1321
    %v1569 = vpack.c.b16 %v1324, %v1323
    %v1570 = vpack.c.b16 %v1326, %v1325
    %v1571 = vpack.c.b16 %v1328, %v1327
    %v1572 = vpack.c.b16 %v1330, %v1329
    %v1573 = vpack.c.b16 %v1332, %v1331
    %v1574 = vpack.c.b16 %v1334, %v1333
    %v1575 = vpack.c.b16 %v1336, %v1335
    %v1576 = vpack.c.b16 %v1338, %v1337
    %v1577 = vpack.c.b16 %v1340, %v1339
    %v1578 = vpack.c.b16 %v1342, %v1341
    %v1579 = vpack.c.b16 %v1344, %v1343
    %v1580 = vpack.c.b16 %v1346, %v1345
    %v1581 = vpack.c.b16 %v1348, %v1347
    %v1582 = vpack.c.b16 %v1350, %v1349
    %v1583 = vpack.c.b16 %v1352, %v1351
    %v1584 = vpack.c.b16 %v1354, %v1353
    %v1585 = vpack.c.b16 %v1356, %v1355
    %v1586 = vpack.c.b16 %v1358, %v1357
    %v1587 = vpack.c.b16 %v1360, %v1359
    %v1588 = vpack.c.b16 %v1362, %v1361
    %v1589 = vpack.c.b16 %v1364, %v1363
    %v1590 = vpack.c.b16 %v1366, %v1365
    %v1591 = vpack.c.b16 %v1368, %v1367
    %v1592 = vpack.c.b16 %v1370, %v1369
    %v1593 = vpack.c.b16 %v1372, %v1371
    %v1594 = vpack.c.b16 %v1374, %v1373
    %v1595 = vpack.c.b16 %v1376, %v1375
    %v1596 = vpack.c.b16 %v1378, %v1377
    %v1597 = vpack.c.b16 %v1380, %v1379
    %v1598 = vpack.c.b16 %v1382, %v1381
    %v1599 = vpack.c.b16 %v1384, %v1383
    %v1600 = vpack.c.b16 %v1386, %v1385
    %v1601 = vpack.c.b16 %v1388, %v1387
    %v1602 = vpack.c.b16 %v1390, %v1389
    %v1603 = vpack.c.b16 %v1392, %v1391
    %v1604 = vpack.c.b16 %v1394, %v1393
    %v1605 = vpack.c.b16 %v1396, %v1395
    %v1606 = vpack.c.b16 %v1398, %v1397
    %v1607 = vpack.c.b16 %v1400, %v1399
    %v1608 = vpack.c.b16 %v1402, %v1401
    %v1609 = vpack.c.b16 %v1404, %v1403
    %v1610 = vpack.c.b16 %v1406, %v1405
    %v1611 = vpack.c.b16 %v1408, %v1407
    %v1612 = vpack.c.b16 %v1410, %v1409
    %v1613 = vpack.c.b16 %v1412, %v1411
    %v1614 = vpack.c.b16 %v1414, %v1413
    %v1615 = vpack.c.b16 %v1416, %v1415
    %v1616 = vpack.c.b16 %v1418, %v1417
    %v1617 = vpack.c.b16 %v1420, %v1419
    %v1618 = vpack.c.b16 %v1422, %v1421
    %v1619 = vpack.c.b16 %v1424, %v1423
    %v1620 = vpack.c.b16 %v1426, %v1425
    %v1621 = vpack.c.b16 %v1428, %v1427
    %v1622 = vpack.c.b16 %v1430, %v1429
    %v1623 = vpack.c.b16 %v1432, %v1431
    %v1624 = vpack.c.b16 %v1434, %v1433
    %v1625 = vpack.c.b16 %v1436, %v1435
    %v1626 = vpack.c.b16 %v1438, %v1437
    %v1627 = vpack.c.b16 %v1440, %v1439
    %v1628 = vpack.c.b16 %v1442, %v1441
    %v1629 = vpack.c.b16 %v1444, %v1443
    %v1630 = vpack.c.b16 %v1446, %v1445
    %v1631 = vpack.c.b16 %v1448, %v1447
    %v1632 = vpack.c.b16 %v1450, %v1449
    %v1633 = vpack.c.b16 %v1452, %v1451
    %v1634 = vpack.c.b16 %v1454, %v1453
    %v1635 = vpack.c.b16 %v1456, %v1455
    %v1636 = vpack.c.b16 %v1458, %v1457
    %v1637 = vpack.c.b16 %v1460, %v1459
    %v1638 = vpack.c.b16 %v1462, %v1461
    %v1639 = vpack.c.b16 %v1464, %v1463
    %v1640 = vpack.c.b16 %v1466, %v1465
    %v1641 = vpack.c.b16 %v1468, %v1467
    %v1642 = vpack.c.b16 %v1470, %v1469
    %v1643 = vpack.c.b16 %v1472, %v1471
    %v1644 = vpack.c.b16 %v1474, %v1473
    %v1645 = vpack.c.b16 %v1476, %v1475
    %v1646 = vpack.c.b16 %v1478, %v1477
    %v1647 = vpack.c.b16 %v1480, %v1479
    %v1648 = vpack.c.b16 %v1482, %v1481
    %v1649 = vpack.c.b16 %v1484, %v1483
    %v1650 = vpack.c.b16 %v1486, %v1485
    %v1651 = vpack.c.b16 %v1488, %v1487
    %v1652 = vpack.c.b16 %v1490, %v1489
    %v1653 = vpack.c.b16 %v1492, %v1491
    %v1654 = vpack.c.b16 %v1494, %v1493
    %v1655 = vpack.c.b16 %v1496, %v1495
    %v1656 = vpack.c.b16 %v1498, %v1497
    %v1657 = vpack.c.b16 %v1500, %v1499
    %v1658 = vpack.c.b16 %v1502, %v1501
    %v1659 = vpack.c.b16 %v1504, %v1503
    %v1660 = vpack.c.b16 %v1506, %v1505
    %v1661 = vpack.c.b16 %v1508, %v1507
    %v1662 = vpack.c.b16 %v1510, %v1509
    %v1663 = vpack.c.b16 %v1512, %v1511
    %v1664 = vpack.c.b16 %v1514, %v1513
    %v1665 = vpack.c.b16 %v1516, %v1515
    %v1666 = vpack.c.b16 %v1518, %v1517
    %v1667 = vpack.c.b16 %v1520, %v1519
    %v1668 = vpack.c.b16 %v1522, %v1521
    %v1669 = vpack.c.b16 %v1524, %v1523
    %v1670 = vpack.c.b16 %v1526, %v1525
    %v1671 = vpack.c.b16 %v1528, %v1527
    %v1672 = vpack.c.b16 %v1530, %v1529
    %v1673 = vpack.c.b16 %v1532, %v1531
    %v1674 = vpack.c.b16 %v1534, %v1533
    %v1675 = vpack.c.b16 %v1536, %v1535
    %v1676 = vpack.c.b16 %v1538, %v1537
    %v1677 = vpack.c.b16 %v1540, %v1539
    %v1678 = vpack.c.b16 %v1542, %v1541
    %v1679 = vpack.c.b16 %v1544, %v1543
    %v1680 = vpack.c.b16 %v1546, %v1545
    %v1681 = vpack.c.b16 %v1548, %v1547
    %v1682 = vpack.c.b16 %v1550, %v1549
    %v1683 = vpack.c.b16 %v1552, %v1551
    %v1684 = vpack.c.b16 %v1554, %v1553
    %v1685 = vpack.c.b16 %v1556, %v1555
    %v1686 = vpack.c.b16 %v1558, %v1557
    %1815 = vmatprep.subr.bf16.mxu0 0
    %1816 = vmatpush1.bf16.msra.mxu0 %v1559
    %1817 = vmatprep.subr.bf16.mxu0 0
    %1818 = vmatpush1.bf16.msra.mxu0 %v1560
    %1819 = vmatprep.subr.bf16.mxu0 0
    %1820 = vmatpush1.bf16.msra.mxu0 %v1561
    %1821 = vmatprep.subr.bf16.mxu0 0
    %1822 = vmatpush1.bf16.msra.mxu0 %v1562
    %1823 = vmatprep.subr.bf16.mxu0 0
    %1824 = vmatpush1.bf16.msra.mxu0 %v1563
    %1825 = vmatprep.subr.bf16.mxu0 0
    %1826 = vmatpush1.bf16.msra.mxu0 %v1564
    %1827 = vmatprep.subr.bf16.mxu0 0
    %1828 = vmatpush1.bf16.msra.mxu0 %v1565
    %1829 = vmatprep.subr.bf16.mxu0 0
    %1830 = vmatpush1.bf16.msra.mxu0 %v1566
    %1831 = vmatprep.subr.bf16.mxu0 0
    %1832 = vmatpush1.bf16.msra.mxu0 %v1567
    %1833 = vmatprep.subr.bf16.mxu0 0
    %1834 = vmatpush1.bf16.msra.mxu0 %v1568
    %1835 = vmatprep.subr.bf16.mxu0 0
    %1836 = vmatpush1.bf16.msra.mxu0 %v1569
    %1837 = vmatprep.subr.bf16.mxu0 0
    %1838 = vmatpush1.bf16.msra.mxu0 %v1570
    %1839 = vmatprep.subr.bf16.mxu0 0
    %1840 = vmatpush1.bf16.msra.mxu0 %v1571
    %1841 = vmatprep.subr.bf16.mxu0 0
    %1842 = vmatpush1.bf16.msra.mxu0 %v1572
    %1843 = vmatprep.subr.bf16.mxu0 0
    %1844 = vmatpush1.bf16.msra.mxu0 %v1573
    %1845 = vmatprep.subr.bf16.mxu0 0
    %1846 = vmatpush1.bf16.msra.mxu0 %v1574
    %1847 = vmatprep.mubr.bf16.mxu0 %v769
    %1848 = vmatmul.mubr.bf16.gmra.mrb[0].mxu0 %v768
    %v1849 = vpop.f32.mrb[0].mxu0
    %v1850 = vadd.f32 %v1045, %v1849
    %v1851 = vpop.f32.mrb[0].mxu0
    %v1852 = vpop.f32.mrb[0].mxu0
    %v1853 = vpop.f32.mrb[0].mxu0
    %1854 = vdwg.mxu0
    %1855 = vmatprep.subr.bf16.mxu0 0
    %1856 = vmatpush1.bf16.msra.mxu0 %v1575
    %1857 = vmatprep.subr.bf16.mxu0 0
    %1858 = vmatpush1.bf16.msra.mxu0 %v1576
    %1859 = vmatprep.subr.bf16.mxu0 0
    %1860 = vmatpush1.bf16.msra.mxu0 %v1577
    %1861 = vmatprep.subr.bf16.mxu0 0
    %1862 = vmatpush1.bf16.msra.mxu0 %v1578
    %1863 = vmatprep.subr.bf16.mxu0 0
    %1864 = vmatpush1.bf16.msra.mxu0 %v1579
    %1865 = vmatprep.subr.bf16.mxu0 0
    %1866 = vmatpush1.bf16.msra.mxu0 %v1580
    %1867 = vmatprep.subr.bf16.mxu0 0
    %1868 = vmatpush1.bf16.msra.mxu0 %v1581
    %1869 = vmatprep.subr.bf16.mxu0 0
    %1870 = vmatpush1.bf16.msra.mxu0 %v1582
    %1871 = vmatprep.subr.bf16.mxu0 0
    %1872 = vmatpush1.bf16.msra.mxu0 %v1583
    %1873 = vmatprep.subr.bf16.mxu0 0
    %1874 = vmatpush1.bf16.msra.mxu0 %v1584
    %1875 = vmatprep.subr.bf16.mxu0 0
    %1876 = vmatpush1.bf16.msra.mxu0 %v1585
    %1877 = vmatprep.subr.bf16.mxu0 0
    %1878 = vmatpush1.bf16.msra.mxu0 %v1586
    %1879 = vmatprep.subr.bf16.mxu0 0
    %1880 = vmatpush1.bf16.msra.mxu0 %v1587
    %1881 = vmatprep.subr.bf16.mxu0 0
    %1882 = vmatpush1.bf16.msra.mxu0 %v1588
    %1883 = vmatprep.subr.bf16.mxu0 0
    %1884 = vmatpush1.bf16.msra.mxu0 %v1589
    %1885 = vmatprep.subr.bf16.mxu0 0
    %1886 = vmatpush1.bf16.msra.mxu0 %v1590
    %1887 = vmatprep.mubr.bf16.mxu0 %v771
    %1888 = vmatmul.mubr.bf16.gmra.mrb[0].mxu0 %v770
    %v1889 = vpop.f32.mrb[0].mxu0
    %v1890 = vadd.f32 %v1850, %v1889
    %v1891 = vpop.f32.mrb[0].mxu0
    %v1892 = vpop.f32.mrb[0].mxu0
    %v1893 = vpop.f32.mrb[0].mxu0
    %1894 = vdwg.mxu0
    %1895 = vmatprep.subr.bf16.mxu0 0
    %1896 = vmatpush1.bf16.msra.mxu0 %v1591
    %1897 = vmatprep.subr.bf16.mxu0 0
    %1898 = vmatpush1.bf16.msra.mxu0 %v1592
    %1899 = vmatprep.subr.bf16.mxu0 0
    %1900 = vmatpush1.bf16.msra.mxu0 %v1593
    %1901 = vmatprep.subr.bf16.mxu0 0
    %1902 = vmatpush1.bf16.msra.mxu0 %v1594
    %1903 = vmatprep.subr.bf16.mxu0 0
    %1904 = vmatpush1.bf16.msra.mxu0 %v1595
    %1905 = vmatprep.subr.bf16.mxu0 0
    %1906 = vmatpush1.bf16.msra.mxu0 %v1596
    %1907 = vmatprep.subr.bf16.mxu0 0
    %1908 = vmatpush1.bf16.msra.mxu0 %v1597
    %1909 = vmatprep.subr.bf16.mxu0 0
    %1910 = vmatpush1.bf16.msra.mxu0 %v1598
    %1911 = vmatprep.subr.bf16.mxu0 0
    %1912 = vmatpush1.bf16.msra.mxu0 %v1599
    %1913 = vmatprep.subr.bf16.mxu0 0
    %1914 = vmatpush1.bf16.msra.mxu0 %v1600
    %1915 = vmatprep.subr.bf16.mxu0 0
    %1916 = vmatpush1.bf16.msra.mxu0 %v1601
    %1917 = vmatprep.subr.bf16.mxu0 0
    %1918 = vmatpush1.bf16.msra.mxu0 %v1602
    %1919 = vmatprep.subr.bf16.mxu0 0
    %1920 = vmatpush1.bf16.msra.mxu0 %v1603
    %1921 = vmatprep.subr.bf16.mxu0 0
    %1922 = vmatpush1.bf16.msra.mxu0 %v1604
    %1923 = vmatprep.subr.bf16.mxu0 0
    %1924 = vmatpush1.bf16.msra.mxu0 %v1605
    %1925 = vmatprep.subr.bf16.mxu0 0
    %1926 = vmatpush1.bf16.msra.mxu0 %v1606
    %1927 = vmatprep.mubr.bf16.mxu0 %v773
    %1928 = vmatmul.mubr.bf16.gmra.mrb[0].mxu0 %v772
    %v1929 = vpop.f32.mrb[0].mxu0
    %v1930 = vadd.f32 %v1890, %v1929
    %v1931 = vpop.f32.mrb[0].mxu0
    %v1932 = vpop.f32.mrb[0].mxu0
    %v1933 = vpop.f32.mrb[0].mxu0
    %1934 = vdwg.mxu0
    %1935 = vmatprep.subr.bf16.mxu0 0
    %1936 = vmatpush1.bf16.msra.mxu0 %v1607
    %1937 = vmatprep.subr.bf16.mxu0 0
    %1938 = vmatpush1.bf16.msra.mxu0 %v1608
    %1939 = vmatprep.subr.bf16.mxu0 0
    %1940 = vmatpush1.bf16.msra.mxu0 %v1609
    %1941 = vmatprep.subr.bf16.mxu0 0
    %1942 = vmatpush1.bf16.msra.mxu0 %v1610
    %1943 = vmatprep.subr.bf16.mxu0 0
    %1944 = vmatpush1.bf16.msra.mxu0 %v1611
    %1945 = vmatprep.subr.bf16.mxu0 0
    %1946 = vmatpush1.bf16.msra.mxu0 %v1612
    %1947 = vmatprep.subr.bf16.mxu0 0
    %1948 = vmatpush1.bf16.msra.mxu0 %v1613
    %1949 = vmatprep.subr.bf16.mxu0 0
    %1950 = vmatpush1.bf16.msra.mxu0 %v1614
    %1951 = vmatprep.subr.bf16.mxu0 0
    %1952 = vmatpush1.bf16.msra.mxu0 %v1615
    %1953 = vmatprep.subr.bf16.mxu0 0
    %1954 = vmatpush1.bf16.msra.mxu0 %v1616
    %1955 = vmatprep.subr.bf16.mxu0 0
    %1956 = vmatpush1.bf16.msra.mxu0 %v1617
    %1957 = vmatprep.subr.bf16.mxu0 0
    %1958 = vmatpush1.bf16.msra.mxu0 %v1618
    %1959 = vmatprep.subr.bf16.mxu0 0
    %1960 = vmatpush1.bf16.msra.mxu0 %v1619
    %1961 = vmatprep.subr.bf16.mxu0 0
    %1962 = vmatpush1.bf16.msra.mxu0 %v1620
    %1963 = vmatprep.subr.bf16.mxu0 0
    %1964 = vmatpush1.bf16.msra.mxu0 %v1621
    %1965 = vmatprep.subr.bf16.mxu0 0
    %1966 = vmatpush1.bf16.msra.mxu0 %v1622
    %1967 = vmatprep.mubr.bf16.mxu0 %v775
    %1968 = vmatmul.mubr.bf16.gmra.mrb[0].mxu0 %v774
    %v1969 = vpop.f32.mrb[0].mxu0
    %v1970 = vadd.f32 %v1930, %v1969
    %v1971 = vpop.f32.mrb[0].mxu0
    %v1972 = vpop.f32.mrb[0].mxu0
    %v1973 = vpop.f32.mrb[0].mxu0
    %1974 = vdwg.mxu0
    %1975 = vmatprep.subr.bf16.mxu0 0
    %1976 = vmatpush1.bf16.msra.mxu0 %v1623
    %1977 = vmatprep.subr.bf16.mxu0 0
    %1978 = vmatpush1.bf16.msra.mxu0 %v1624
    %1979 = vmatprep.subr.bf16.mxu0 0
    %1980 = vmatpush1.bf16.msra.mxu0 %v1625
    %1981 = vmatprep.subr.bf16.mxu0 0
    %1982 = vmatpush1.bf16.msra.mxu0 %v1626
    %1983 = vmatprep.subr.bf16.mxu0 0
    %1984 = vmatpush1.bf16.msra.mxu0 %v1627
    %1985 = vmatprep.subr.bf16.mxu0 0
    %1986 = vmatpush1.bf16.msra.mxu0 %v1628
    %1987 = vmatprep.subr.bf16.mxu0 0
    %1988 = vmatpush1.bf16.msra.mxu0 %v1629
    %1989 = vmatprep.subr.bf16.mxu0 0
    %1990 = vmatpush1.bf16.msra.mxu0 %v1630
    %1991 = vmatprep.subr.bf16.mxu0 0
    %1992 = vmatpush1.bf16.msra.mxu0 %v1631
    %1993 = vmatprep.subr.bf16.mxu0 0
    %1994 = vmatpush1.bf16.msra.mxu0 %v1632
    %1995 = vmatprep.subr.bf16.mxu0 0
    %1996 = vmatpush1.bf16.msra.mxu0 %v1633
    %1997 = vmatprep.subr.bf16.mxu0 0
    %1998 = vmatpush1.bf16.msra.mxu0 %v1634
    %1999 = vmatprep.subr.bf16.mxu0 0
    %2000 = vmatpush1.bf16.msra.mxu0 %v1635
    %2001 = vmatprep.subr.bf16.mxu0 0
    %2002 = vmatpush1.bf16.msra.mxu0 %v1636
    %2003 = vmatprep.subr.bf16.mxu0 0
    %2004 = vmatpush1.bf16.msra.mxu0 %v1637
    %2005 = vmatprep.subr.bf16.mxu0 0
    %2006 = vmatpush1.bf16.msra.mxu0 %v1638
    %2007 = vmatprep.mubr.bf16.mxu0 %v777
    %2008 = vmatmul.mubr.bf16.gmra.mrb[0].mxu0 %v776
    %v2009 = vpop.f32.mrb[0].mxu0
    %v2010 = vadd.f32 %v1970, %v2009
    %v2011 = vpop.f32.mrb[0].mxu0
    %v2012 = vpop.f32.mrb[0].mxu0
    %v2013 = vpop.f32.mrb[0].mxu0
    %2014 = vdwg.mxu0
    %2015 = vmatprep.subr.bf16.mxu0 0
    %2016 = vmatpush1.bf16.msra.mxu0 %v1639
    %2017 = vmatprep.subr.bf16.mxu0 0
    %2018 = vmatpush1.bf16.msra.mxu0 %v1640
    %2019 = vmatprep.subr.bf16.mxu0 0
    %2020 = vmatpush1.bf16.msra.mxu0 %v1641
    %2021 = vmatprep.subr.bf16.mxu0 0
    %2022 = vmatpush1.bf16.msra.mxu0 %v1642
    %2023 = vmatprep.subr.bf16.mxu0 0
    %2024 = vmatpush1.bf16.msra.mxu0 %v1643
    %2025 = vmatprep.subr.bf16.mxu0 0
    %2026 = vmatpush1.bf16.msra.mxu0 %v1644
    %2027 = vmatprep.subr.bf16.mxu0 0
    %2028 = vmatpush1.bf16.msra.mxu0 %v1645
    %2029 = vmatprep.subr.bf16.mxu0 0
    %2030 = vmatpush1.bf16.msra.mxu0 %v1646
    %2031 = vmatprep.subr.bf16.mxu0 0
    %2032 = vmatpush1.bf16.msra.mxu0 %v1647
    %2033 = vmatprep.subr.bf16.mxu0 0
    %2034 = vmatpush1.bf16.msra.mxu0 %v1648
    %2035 = vmatprep.subr.bf16.mxu0 0
    %2036 = vmatpush1.bf16.msra.mxu0 %v1649
    %2037 = vmatprep.subr.bf16.mxu0 0
    %2038 = vmatpush1.bf16.msra.mxu0 %v1650
    %2039 = vmatprep.subr.bf16.mxu0 0
    %2040 = vmatpush1.bf16.msra.mxu0 %v1651
    %2041 = vmatprep.subr.bf16.mxu0 0
    %2042 = vmatpush1.bf16.msra.mxu0 %v1652
    %2043 = vmatprep.subr.bf16.mxu0 0
    %2044 = vmatpush1.bf16.msra.mxu0 %v1653
    %2045 = vmatprep.subr.bf16.mxu0 0
    %2046 = vmatpush1.bf16.msra.mxu0 %v1654
    %2047 = vmatprep.mubr.bf16.mxu0 %v779
    %2048 = vmatmul.mubr.bf16.gmra.mrb[0].mxu0 %v778
    %v2049 = vpop.f32.mrb[0].mxu0
    %v2050 = vadd.f32 %v2010, %v2049
    %v2051 = vpop.f32.mrb[0].mxu0
    %v2052 = vpop.f32.mrb[0].mxu0
    %v2053 = vpop.f32.mrb[0].mxu0
    %2054 = vdwg.mxu0
    %2055 = vmatprep.subr.bf16.mxu0 0
    %2056 = vmatpush1.bf16.msra.mxu0 %v1655
    %2057 = vmatprep.subr.bf16.mxu0 0
    %2058 = vmatpush1.bf16.msra.mxu0 %v1656
    %2059 = vmatprep.subr.bf16.mxu0 0
    %2060 = vmatpush1.bf16.msra.mxu0 %v1657
    %2061 = vmatprep.subr.bf16.mxu0 0
    %2062 = vmatpush1.bf16.msra.mxu0 %v1658
    %2063 = vmatprep.subr.bf16.mxu0 0
    %2064 = vmatpush1.bf16.msra.mxu0 %v1659
    %2065 = vmatprep.subr.bf16.mxu0 0
    %2066 = vmatpush1.bf16.msra.mxu0 %v1660
    %2067 = vmatprep.subr.bf16.mxu0 0
    %2068 = vmatpush1.bf16.msra.mxu0 %v1661
    %2069 = vmatprep.subr.bf16.mxu0 0
    %2070 = vmatpush1.bf16.msra.mxu0 %v1662
    %2071 = vmatprep.subr.bf16.mxu0 0
    %2072 = vmatpush1.bf16.msra.mxu0 %v1663
    %2073 = vmatprep.subr.bf16.mxu0 0
    %2074 = vmatpush1.bf16.msra.mxu0 %v1664
    %2075 = vmatprep.subr.bf16.mxu0 0
    %2076 = vmatpush1.bf16.msra.mxu0 %v1665
    %2077 = vmatprep.subr.bf16.mxu0 0
    %2078 = vmatpush1.bf16.msra.mxu0 %v1666
    %2079 = vmatprep.subr.bf16.mxu0 0
    %2080 = vmatpush1.bf16.msra.mxu0 %v1667
    %2081 = vmatprep.subr.bf16.mxu0 0
    %2082 = vmatpush1.bf16.msra.mxu0 %v1668
    %2083 = vmatprep.subr.bf16.mxu0 0
    %2084 = vmatpush1.bf16.msra.mxu0 %v1669
    %2085 = vmatprep.subr.bf16.mxu0 0
    %2086 = vmatpush1.bf16.msra.mxu0 %v1670
    %2087 = vmatprep.mubr.bf16.mxu0 %v781
    %2088 = vmatmul.mubr.bf16.gmra.mrb[0].mxu0 %v780
    %v2089 = vpop.f32.mrb[0].mxu0
    %v2090 = vadd.f32 %v2050, %v2089
    %v2091 = vpop.f32.mrb[0].mxu0
    %v2092 = vpop.f32.mrb[0].mxu0
    %v2093 = vpop.f32.mrb[0].mxu0
    %2094 = vdwg.mxu0
    %2095 = vmatprep.subr.bf16.mxu0 0
    %2096 = vmatpush1.bf16.msra.mxu0 %v1671
    %2097 = vmatprep.subr.bf16.mxu0 0
    %2098 = vmatpush1.bf16.msra.mxu0 %v1672
    %2099 = vmatprep.subr.bf16.mxu0 0
    %2100 = vmatpush1.bf16.msra.mxu0 %v1673
    %2101 = vmatprep.subr.bf16.mxu0 0
    %2102 = vmatpush1.bf16.msra.mxu0 %v1674
    %2103 = vmatprep.subr.bf16.mxu0 0
    %2104 = vmatpush1.bf16.msra.mxu0 %v1675
    %2105 = vmatprep.subr.bf16.mxu0 0
    %2106 = vmatpush1.bf16.msra.mxu0 %v1676
    %2107 = vmatprep.subr.bf16.mxu0 0
    %2108 = vmatpush1.bf16.msra.mxu0 %v1677
    %2109 = vmatprep.subr.bf16.mxu0 0
    %2110 = vmatpush1.bf16.msra.mxu0 %v1678
    %2111 = vmatprep.subr.bf16.mxu0 0
    %2112 = vmatpush1.bf16.msra.mxu0 %v1679
    %2113 = vmatprep.subr.bf16.mxu0 0
    %2114 = vmatpush1.bf16.msra.mxu0 %v1680
    %2115 = vmatprep.subr.bf16.mxu0 0
    %2116 = vmatpush1.bf16.msra.mxu0 %v1681
    %2117 = vmatprep.subr.bf16.mxu0 0
    %2118 = vmatpush1.bf16.msra.mxu0 %v1682
    %2119 = vmatprep.subr.bf16.mxu0 0
    %2120 = vmatpush1.bf16.msra.mxu0 %v1683
    %2121 = vmatprep.subr.bf16.mxu0 0
    %2122 = vmatpush1.bf16.msra.mxu0 %v1684
    %2123 = vmatprep.subr.bf16.mxu0 0
    %2124 = vmatpush1.bf16.msra.mxu0 %v1685
    %2125 = vmatprep.subr.bf16.mxu0 0
    %2126 = vmatpush1.bf16.msra.mxu0 %v1686
    %2127 = vmatprep.mubr.bf16.mxu0 %v783
    %2128 = vmatmul.mubr.bf16.gmra.mrb[0].mxu0 %v782
    %v2129 = vpop.f32.mrb[0].mxu0
    %v2130 = vadd.f32 %v2090, %v2129
    %v2131 = vpop.f32.mrb[0].mxu0
    %v2132 = vpop.f32.mrb[0].mxu0
    %v2133 = vpop.f32.mrb[0].mxu0
    %2134 = vdwg.mxu0
    %v2135 = vadd.f32 %v143, %v2130
    %v2136 = vsel %vm66, %v2135, 0.0
    %2137 = vadd.xlane.f32.xlu0 %v2136
    %v2138 = vpop.xlane.xlu0 %2137
    %v2139 = vmul.f32 %v2138, %v114
    %v2140 = vmul.f32 %v2135, %v2135
    %v2141 = vsel %vm66, %v2140, 0.0
    %2142 = vadd.xlane.f32.xlu0 %v2141
    %v2143 = vpop.xlane.xlu0 %2142
    %v2144 = vmul.f32 %v2143, %v114
    %v2145 = vmul.f32 %v2139, %v2139
    %v2146 = vsub.f32 %v2144, %v2145
    %v2147 = vmax.f32 %v2146, 0.0
    %v2148 = vsub.f32 %v2135, %v2139
    %v2149 = vadd.f32 %v2147, 1e-05
    %v2150 = vrsqrt.pop %v2149
    %v2151 = vmul.f32 %v2148, %v2150
    %v2152 = vld [vmem:[%s9] sm:$0x1]
    %v2154 = vlaneseq
    %v2155 = vshrl.u32 %v2154, 7
    %v2156 = vsub.s32 0, %v2155
    %v2157 = vrot.slane %v2152, %v2156
    %v2159 = vmul.f32 %v2151, %v2157
    %v2160 = vsel %vm66, %v2159, 0.0
    %2161 = vadd.xlane.f32.xlu0 %v2160
    %v2162 = vpop.xlane.xlu0 %2161
    %s2163 = sld [smem:[#allocation2]]
    %v2164 = vstv %s2163
    %v2165 = vadd.f32 %v2162, %v2164
    %v2167 = vlaneseq
    %v2168 = vand.u32 %v2167, 127
    %v2169 = vlaneseq
    %v2170 = vshrl.u32 %v2169, 7
    %v2171 = vsub.s32 %v2168, %v2170
    %v2172 = vrot.slane %v2165, %v2171
    %vm2174 = vcmask 57344
    %2175 = vst.msk [vmem:[#allocation3] sm:$0x1] %vm2174, %v2172
    // Predicated region
    $region46: #{tpu_custom_call.1} parent=1 // pred_check
      _
    $region47: #{tpu_custom_call.1} parent=1 // pred_check_branch
      %2177 = sbr.rel (0) target = $region49
    $region48: #{tpu_custom_call.1} parent=1 // pred_region
      %s2179 = ssub.s32 16, 16
      %2180 = vsyncadd [#allocation4], %s2179
      %s2182 = sshll.u32 [#allocation3], 4
      %s2183 = int_to_ptr.vmem [resolvable:$true] %s2182
      %2185 = dma.vmem_to_hbm [thread:$0]  %s2183, 16, %s11, [#allocation4]
    $region49: #{tpu_custom_call.1} parent=1 // pred_fallthru
      _
    // Predicated region
    $region50: #{tpu_custom_call.1} parent=1 // pred_check
      _
    $region51: #{tpu_custom_call.1} parent=1 // pred_check_branch
      %2187 = sbr.rel (0) target = $region53
    $region52: #{tpu_custom_call.1} parent=1 // pred_region
      %2188 = dma.done [#allocation4], 16
    $region53: #{tpu_custom_call.1} parent=1 // pred_fallthru
      _
    %2189 = vsyncpa [#allocation4], 1

</llo_original>
